<compile_context>
chip_gen: v5e
topology: v5e:2x2
jax: 0.10.0
libtpu: 0.0.40
codegen_flags: <defaults>
</compile_context>

<pallas_src>
import functools

import jax
import jax.numpy as jnp
from jax.experimental import pallas as pl
from jax.experimental.pallas import tpu as pltpu

LN_EPS = 1e-5

# HIGHEST only on the 3 surviving weight matmuls (see header note (5)).
_dot_hi = functools.partial(jnp.dot, precision=jax.lax.Precision.HIGHEST,
                            preferred_element_type=jnp.float32)


def _gelu(x):
    # exact (erf-based) GELU == torch.nn.functional.gelu default
    return 0.5 * x * (1.0 + jax.lax.erf(x * jnp.float32(0.7071067811865476)))


# --------------------------------------------------------------------------
# Kernel: grid-less, whole-array VMEM resident, 3 MXU dots + XLU reductions.
# --------------------------------------------------------------------------
def com_block_kernel(img_ref, seq_ref, prm_ref, img_out_ref, seq_out_ref,
                     *, n_img, n_seq, c2):
    D = img_ref.shape[-1]
    R = n_img + n_seq
    inv_d = jnp.float32(1.0 / D)

    # stack both streams into one row slab: (B*(P+S), D)
    x = jnp.concatenate([img_ref[...], seq_ref[...]], axis=0).astype(jnp.float32)

    # static views into the single fused parameter slab (layout documented in
    # prepare_com_block_params); static slices are zero-cost.
    r1, r2, r3 = D, D + R, D + R + c2
    w1cat  = prm_ref[0:r1, 0:2 * D]          # (D, 2D)  [img W1' | seq W1']
    w1cs   = prm_ref[r1:r2, 0:D]             # (R, D)   per-row colsum(W1')
    b1g    = prm_ref[r1:r2, D:2 * D]         # (R, D)   per-row folded bias
    w_conv = prm_ref[r2:r3, 0:R]             # (c2, R)  block-diag 1x1 conv
    bc     = prm_ref[r2:r3, R:R + D]         # (c2, D)  conv bias (lane-bcast)
    w_att  = prm_ref[r3:r3 + R, 0:c2]        # (R, c2)  block att weight
    b_att  = prm_ref[r3:r3 + R, c2:c2 + 1]   # (R, 1)

    # Row-wise LayerNorm stats: exact f32 cross-lane sums on the XLU.
    # Independent of the x @ W1' dot below, so both pipeline.
    mu = jnp.sum(x, axis=-1, keepdims=True) * inv_d
    ex2 = jnp.sum(x * x, axis=-1, keepdims=True) * inv_d
    inv_std = jax.lax.rsqrt(ex2 - mu * mu + LN_EPS)

    # Fused channel projection for BOTH streams in one MXU dot; LayerNorm
    # gamma/beta already folded into W1'/b1' in the wrapper, so this dot does
    # not wait on the stats above.
    p_wide = _dot_hi(x, w1cat)                                    # (R, 2D)
    is_img = jax.lax.broadcasted_iota(jnp.int32, (R, 1), 0) < n_img
    p = jnp.where(is_img, p_wide[:, :D], p_wide[:, D:])           # (R, D)
    z = _gelu((p - mu * w1cs) * inv_std + b1g)                    # (R, D)

    # 1x1 Conv1d for the whole batch & both streams: one block-diag MXU dot.
    u = _gelu(_dot_hi(w_conv, z) + bc)                            # (c2, D)

    # mean-pool over d_model (exact XLU reduction, no MXU round-trip)
    pool = jnp.sum(u, axis=-1, keepdims=True) * inv_d             # (c2, 1)

    # batched attention projection + sigmoid via the block weight, then gate.
    att = jax.nn.sigmoid(_dot_hi(w_att, pool) + b_att)            # (R, 1)
    out = x * att                                                 # (R, D)

    img_out_ref[...] = out[:n_img].astype(img_out_ref.dtype)
    seq_out_ref[...] = out[n_img:].astype(seq_out_ref.dtype)


# --------------------------------------------------------------------------
# One-time parameter fusion (hoisted out of the per-call path).
# --------------------------------------------------------------------------
def prepare_com_block_params(params, batch, num_patches, seq_len):
    B, P, S = batch, num_patches, seq_len
    D = params["i_w1"].shape[0]
    C = params["i_wc"].shape[0]          # c_com
    R = B * (P + S)
    C2 = 2 * B * C
    f32 = jnp.float32
    eye_b = jnp.eye(B, dtype=f32)

    def fold_ln(gamma, beta, w1, b1):
        # y = xhat*gamma + beta ; y@w1 + b1 == xhat@W1' + b1'
        w1g = w1 * gamma.reshape(-1, 1)                       # diag(gamma)@W1
        b1g = (beta.reshape(1, -1) @ w1) + b1.reshape(1, -1)  # (1, D)
        colsum = jnp.sum(w1g, axis=0, keepdims=True)          # ones(1,D)@W1'
        return w1g, b1g, colsum

    i_w1g, i_b1g, i_cs = fold_ln(params["i_lng"], params["i_lnb"],
                                 params["i_w1"], params["i_b1"])
    s_w1g, s_b1g, s_cs = fold_ln(params["s_lng"], params["s_lnb"],
                                 params["s_w1"], params["s_b1"])

    # lane-concat of both streams' folded channel projections
    w1cat = jnp.concatenate([i_w1g, s_w1g], axis=1)                    # (D, 2D)

    # per-row constants matched to the stacked [img rows ; seq rows] layout
    w1cs_rows = jnp.concatenate([jnp.tile(i_cs, (B * P, 1)),
                                 jnp.tile(s_cs, (B * S, 1))], axis=0)  # (R, D)
    b1g_rows = jnp.concatenate([jnp.tile(i_b1g, (B * P, 1)),
                                jnp.tile(s_b1g, (B * S, 1))], axis=0)  # (R, D)
    row_const = jnp.concatenate([w1cs_rows, b1g_rows], axis=1)         # (R, 2D)

    # block-diagonal 1x1 conv over batch and both streams
    w_conv = jnp.block([
        [jnp.kron(eye_b, params["i_wc"]), jnp.zeros((B * C, B * S), f32)],
        [jnp.zeros((B * C, B * P), f32), jnp.kron(eye_b, params["s_wc"])],
    ])                                                                 # (C2, R)
    bc_rows = jnp.concatenate(
        [jnp.tile(params["i_bc"].reshape(-1, 1), (B, 1)),
         jnp.tile(params["s_bc"].reshape(-1, 1), (B, 1))], axis=0)     # (C2, 1)
    bc_bcast = jnp.tile(bc_rows, (1, D))                               # (C2, D)

    # att_proj re-expressed on the batch-flattened pools
    wa, ba = params["wa"], params["ba"]         # (P+S, 2C), (P+S,)
    w_att = jnp.block([
        [jnp.kron(eye_b, wa[:P, :C]), jnp.kron(eye_b, wa[:P, C:])],
        [jnp.kron(eye_b, wa[P:, :C]), jnp.kron(eye_b, wa[P:, C:])],
    ])                                                                 # (R, C2)
    b_att = jnp.concatenate([jnp.tile(ba[:P].reshape(-1, 1), (B, 1)),
                             jnp.tile(ba[P:].reshape(-1, 1), (B, 1))],
                            axis=0)                                    # (R, 1)

    # pack everything into ONE lane-padded parameter slab (single DMA)
    width = max(2 * D, R + D, C2 + 1)

    def pad(a):
        return jnp.pad(a, ((0, 0), (0, width - a.shape[1])))

    slab = jnp.concatenate([
        pad(w1cat),                                          # rows [0, D)
        pad(row_const),                                      # rows [D, D+R)
        pad(jnp.concatenate([w_conv, bc_bcast], axis=1)),    # rows [D+R, D+R+C2)
        pad(jnp.concatenate([w_att, b_att], axis=1)),        # rows [D+R+C2, ..+R)
    ], axis=0).astype(f32)

    dims = dict(B=B, P=P, S=S, D=D, C=C, R=R, C2=C2)
    return slab, dims


# --------------------------------------------------------------------------
# Per-call wrapper: reshape (free) + grid-less pallas_call.
# --------------------------------------------------------------------------
def com_block(img_emb, seq_emb, prm_slab, dims):
    B, P, S, D = dims["B"], dims["P"], dims["S"], dims["D"]
    n_img, n_seq, c2 = B * P, B * S, dims["C2"]
    assert img_emb.shape == (B, P, D) and seq_emb.shape == (B, S, D)

    kernel = functools.partial(com_block_kernel,
                               n_img=n_img, n_seq=n_seq, c2=c2)
    vmem = pl.BlockSpec(memory_space=pltpu.MemorySpace.VMEM)

    img_out, seq_out = pl.pallas_call(
        kernel,
        out_shape=(jax.ShapeDtypeStruct((n_img, D), img_emb.dtype),
                   jax.ShapeDtypeStruct((n_seq, D), seq_emb.dtype)),
        in_specs=[vmem, vmem, vmem],
        out_specs=(vmem, vmem),
        input_output_aliases={0: 0, 1: 1},   # outputs reuse the input buffers
    )(img_emb.reshape(n_img, D), seq_emb.reshape(n_seq, D), prm_slab)

    return img_out.reshape(B, P, D), seq_out.reshape(B, S, D)


# ------------------------- pure-JAX reference -------------------------------
def _ref_com_unit(x, gamma, beta, w1, b1, wc, bc):
    mu = x.mean(-1, keepdims=True)
    var = ((x - mu) ** 2).mean(-1, keepdims=True)
    y = (x - mu) / jnp.sqrt(var + LN_EPS) * gamma + beta
    z = _gelu(jnp.einsum("btd,de->bte", y, w1, precision="highest") + b1)
    u = _gelu(jnp.einsum("ot,btd->bod", wc, z, precision="highest")
              + bc[None, :, None])
    return u


def _ref_com_block(img, seq, p, num_patches):
    iu = _ref_com_unit(img, p["i_lng"], p["i_lnb"], p["i_w1"], p["i_b1"],
                       p["i_wc"], p["i_bc"])
    su = _ref_com_unit(seq, p["s_lng"], p["s_lnb"], p["s_w1"], p["s_b1"],
                       p["s_wc"], p["s_bc"])
    att_emb = jnp.concatenate([iu.mean(-1), su.mean(-1)], axis=-1)     # (B, 2C)
    att = jax.nn.sigmoid(
        jnp.einsum("bk,ok->bo", att_emb, p["wa"], precision="highest")
        + p["ba"])                                                     # (B, P+S)
    img_att = att[:, :num_patches, None]
    seq_att = att[:, num_patches:, None]
    return img * img_att, seq * seq_att


# ------------------------------- main ----------------------------------------
if __name__ == "__main__":
    # hp: d_model=32, c_com=4, num_patches=8, seq_len=8, batch=2
    B, P, S, D, C = 2, 8, 8, 32, 4

    key = jax.random.PRNGKey(0)
    ks = jax.random.split(key, 16)

    def w(k, shape, scale=0.1):
        return (scale * jax.random.normal(k, shape)).astype(jnp.float32)

    params = {
        # i2e Com_unit (in_ch = num_patches)
        "i_lng": 1.0 + w(ks[0], (D,)),        # LayerNorm gamma (non-trivial
        "i_lnb": w(ks[1], (D,), 0.05),        #  values to exercise the fold)
        "i_w1": w(ks[2], (D, D)),             # Linear weight stored (in, out)
        "i_b1": w(ks[3], (D,), 0.05),
        "i_wc": w(ks[4], (C, P)),             # Conv1d(k=1) weight (out, in)
        "i_bc": w(ks[5], (C,), 0.05),
        # s2e Com_unit (in_ch = seq_len)
        "s_lng": 1.0 + w(ks[6], (D,)),
        "s_lnb": w(ks[7], (D,), 0.05),
        "s_w1": w(ks[8], (D, D)),
        "s_b1": w(ks[9], (D,), 0.05),
        "s_wc": w(ks[10], (C, S)),
        "s_bc": w(ks[11], (C,), 0.05),
        # att_proj: Linear(2*c_com -> P+S), Sigmoid (torch layout (out, in))
        "wa": w(ks[12], (P + S, 2 * C)),
        "ba": w(ks[13], (P + S,), 0.05),
    }

    img_emb = jax.random.normal(ks[14], (B, P, D), dtype=jnp.float32)
    seq_emb = jax.random.normal(ks[15], (B, S, D), dtype=jnp.float32)

    # one-time parameter fusion (hoisted out of the per-call path; reused for
    # every subsequent forward)
    prm_slab, dims = prepare_com_block_params(params, B, P, S)
    jax.block_until_ready(prm_slab)

    # reference computed first (from the torch-layout params)
    img_expect, seq_expect = _ref_com_block(img_emb, seq_emb, params, P)

    img_out, seq_out = com_block(img_emb, seq_emb, prm_slab, dims)
    jax.block_until_ready((img_out, seq_out))

    assert img_out.shape == (B, P, D) and seq_out.shape == (B, S, D)
    assert jnp.allclose(img_out, img_expect, rtol=1e-4, atol=1e-4), "img_out mismatch"
    assert jnp.allclose(seq_out, seq_expect, rtol=1e-4, atol=1e-4), "seq_out mismatch"

    print("KERNEL_OK")
</pallas_src>

<mosaic_0001>
module attributes {stable_mosaic.version = 11 : i64} {
  func.func @com_block_kernel(%arg0: memref<16x32xf32, #tpu.memory_space<vmem>>, %arg1: memref<16x32xf32, #tpu.memory_space<vmem>>, %arg2: memref<112x64xf32, #tpu.memory_space<vmem>>, %arg3: memref<16x32xf32, #tpu.memory_space<vmem>>, %arg4: memref<16x32xf32, #tpu.memory_space<vmem>>) attributes {dimension_semantics = [], scalar_prefetch = 0 : i64, scratch_operands = 0 : i64, tpu.core_type = #tpu.core_type<tc>} {
    %c0 = arith.constant 0 : index
    %c0_0 = arith.constant 0 : index
    %0 = vector.load %arg0[%c0, %c0_0] : memref<16x32xf32, #tpu.memory_space<vmem>>, vector<16x32xf32>
    %c0_1 = arith.constant 0 : index
    %c0_2 = arith.constant 0 : index
    %1 = vector.load %arg1[%c0_1, %c0_2] : memref<16x32xf32, #tpu.memory_space<vmem>>, vector<16x32xf32>
    %2 = tpu.concatenate %0, %1 in 0 : vector<16x32xf32>, vector<16x32xf32> -> vector<32x32xf32>
    %c0_3 = arith.constant 0 : index
    %c0_4 = arith.constant 0 : index
    %3 = vector.load %arg2[%c0_3, %c0_4] : memref<112x64xf32, #tpu.memory_space<vmem>>, vector<32x64xf32>
    %c32 = arith.constant 32 : index
    %c0_5 = arith.constant 0 : index
    %4 = vector.load %arg2[%c32, %c0_5] : memref<112x64xf32, #tpu.memory_space<vmem>>, vector<32x32xf32>
    %c32_6 = arith.constant 32 : index
    %c32_7 = arith.constant 32 : index
    %5 = vector.load %arg2[%c32_6, %c32_7] : memref<112x64xf32, #tpu.memory_space<vmem>>, vector<32x32xf32>
    %c64 = arith.constant 64 : index
    %c0_8 = arith.constant 0 : index
    %6 = vector.load %arg2[%c64, %c0_8] : memref<112x64xf32, #tpu.memory_space<vmem>>, vector<16x32xf32>
    %c64_9 = arith.constant 64 : index
    %c32_10 = arith.constant 32 : index
    %7 = vector.load %arg2[%c64_9, %c32_10] : memref<112x64xf32, #tpu.memory_space<vmem>>, vector<16x32xf32>
    %c80 = arith.constant 80 : index
    %c0_11 = arith.constant 0 : index
    %8 = vector.load %arg2[%c80, %c0_11] : memref<112x64xf32, #tpu.memory_space<vmem>>, vector<32x16xf32>
    %c80_12 = arith.constant 80 : index
    %c16 = arith.constant 16 : index
    %9 = vector.load %arg2[%c80_12, %c16] : memref<112x64xf32, #tpu.memory_space<vmem>>, vector<32x1xf32>
    %cst = arith.constant dense<0.000000e+00> : vector<32xf32>
    %10 = vector.multi_reduction <add>, %2, %cst [1] : vector<32x32xf32> to vector<32xf32>
    %11 = vector.shape_cast %10 : vector<32xf32> to vector<32x1xf32>
    %cst_13 = arith.constant 3.125000e-02 : f32
    %12 = vector.broadcast %cst_13 : f32 to vector<32x1xf32>
    %13 = arith.mulf %11, %12 : vector<32x1xf32>
    %14 = arith.mulf %2, %2 : vector<32x32xf32>
    %cst_14 = arith.constant dense<0.000000e+00> : vector<32xf32>
    %15 = vector.multi_reduction <add>, %14, %cst_14 [1] : vector<32x32xf32> to vector<32xf32>
    %16 = vector.shape_cast %15 : vector<32xf32> to vector<32x1xf32>
    %cst_15 = arith.constant 3.125000e-02 : f32
    %17 = vector.broadcast %cst_15 : f32 to vector<32x1xf32>
    %18 = arith.mulf %16, %17 : vector<32x1xf32>
    %19 = arith.mulf %13, %13 : vector<32x1xf32>
    %20 = arith.subf %18, %19 : vector<32x1xf32>
    %cst_16 = arith.constant 9.99999974E-6 : f32
    %21 = vector.broadcast %cst_16 : f32 to vector<32x1xf32>
    %22 = arith.addf %20, %21 : vector<32x1xf32>
    %23 = math.rsqrt %22 : vector<32x1xf32>
    %cst_17 = arith.constant dense<0.000000e+00> : vector<32x64xf32>
    %24 = tpu.matmul %2, %3, %cst_17 {dimension_numbers = #tpu.dot_dimension_numbers<[1], [0], [0], [1], [0, 0, 1, 1], [], []>, precision = #tpu.contract_precision<fp32>} : vector<32x32xf32>, vector<32x64xf32>, vector<32x64xf32> -> vector<32x64xf32>
    %25 = tpu.iota {dimensions = array<i32: 0>} : vector<32x1xi32>
    %c16_i32 = arith.constant 16 : i32
    %26 = vector.broadcast %c16_i32 : i32 to vector<32x1xi32>
    %27 = arith.cmpi slt, %25, %26 : vector<32x1xi32>
    %28 = vector.extract_strided_slice %24 {offsets = [0, 0], sizes = [32, 32], strides = [1, 1]} : vector<32x64xf32> to vector<32x32xf32>
    %29 = vector.extract_strided_slice %24 {offsets = [0, 32], sizes = [32, 32], strides = [1, 1]} : vector<32x64xf32> to vector<32x32xf32>
    %30 = vector.shape_cast %27 : vector<32x1xi1> to vector<32x1xi1>
    %31 = vector.broadcast %30 : vector<32x1xi1> to vector<32x32xi1>
    %32 = arith.select %31, %28, %29 : vector<32x32xi1>, vector<32x32xf32>
    %33 = vector.broadcast %13 : vector<32x1xf32> to vector<32x32xf32>
    %34 = arith.mulf %33, %4 : vector<32x32xf32>
    %35 = arith.subf %32, %34 : vector<32x32xf32>
    %36 = vector.broadcast %23 : vector<32x1xf32> to vector<32x32xf32>
    %37 = arith.mulf %35, %36 : vector<32x32xf32>
    %38 = arith.addf %37, %5 : vector<32x32xf32>
    %cst_18 = arith.constant 5.000000e-01 : f32
    %39 = vector.broadcast %cst_18 : f32 to vector<32x32xf32>
    %40 = arith.mulf %39, %38 : vector<32x32xf32>
    %cst_19 = arith.constant 0.707106769 : f32
    %41 = vector.broadcast %cst_19 : f32 to vector<32x32xf32>
    %42 = arith.mulf %38, %41 : vector<32x32xf32>
    %43 = math.erf %42 : vector<32x32xf32>
    %cst_20 = arith.constant 1.000000e+00 : f32
    %44 = vector.broadcast %cst_20 : f32 to vector<32x32xf32>
    %45 = arith.addf %44, %43 : vector<32x32xf32>
    %46 = arith.mulf %40, %45 : vector<32x32xf32>
    %cst_21 = arith.constant dense<0.000000e+00> : vector<16x32xf32>
    %47 = tpu.matmul %6, %46, %cst_21 {dimension_numbers = #tpu.dot_dimension_numbers<[1], [0], [0], [1], [0, 0, 1, 1], [], []>, precision = #tpu.contract_precision<fp32>} : vector<16x32xf32>, vector<32x32xf32>, vector<16x32xf32> -> vector<16x32xf32>
    %48 = arith.addf %47, %7 : vector<16x32xf32>
    %cst_22 = arith.constant 5.000000e-01 : f32
    %49 = vector.broadcast %cst_22 : f32 to vector<16x32xf32>
    %50 = arith.mulf %49, %48 : vector<16x32xf32>
    %cst_23 = arith.constant 0.707106769 : f32
    %51 = vector.broadcast %cst_23 : f32 to vector<16x32xf32>
    %52 = arith.mulf %48, %51 : vector<16x32xf32>
    %53 = math.erf %52 : vector<16x32xf32>
    %cst_24 = arith.constant 1.000000e+00 : f32
    %54 = vector.broadcast %cst_24 : f32 to vector<16x32xf32>
    %55 = arith.addf %54, %53 : vector<16x32xf32>
    %56 = arith.mulf %50, %55 : vector<16x32xf32>
    %cst_25 = arith.constant dense<0.000000e+00> : vector<16xf32>
    %57 = vector.multi_reduction <add>, %56, %cst_25 [1] : vector<16x32xf32> to vector<16xf32>
    %58 = vector.shape_cast %57 : vector<16xf32> to vector<16x1xf32>
    %cst_26 = arith.constant 3.125000e-02 : f32
    %59 = vector.broadcast %cst_26 : f32 to vector<16x1xf32>
    %60 = arith.mulf %58, %59 : vector<16x1xf32>
    %cst_27 = arith.constant dense<0.000000e+00> : vector<32x1xf32>
    %61 = tpu.matmul %8, %60, %cst_27 {dimension_numbers = #tpu.dot_dimension_numbers<[1], [0], [0], [1], [0, 0, 1, 1], [], []>, precision = #tpu.contract_precision<fp32>} : vector<32x16xf32>, vector<16x1xf32>, vector<32x1xf32> -> vector<32x1xf32>
    %62 = arith.addf %61, %9 : vector<32x1xf32>
    %63 = arith.negf %62 : vector<32x1xf32>
    %64 = math.exp %63 : vector<32x1xf32>
    %cst_28 = arith.constant 1.000000e+00 : f32
    %65 = vector.broadcast %cst_28 : f32 to vector<32x1xf32>
    %66 = arith.addf %65, %64 : vector<32x1xf32>
    %67 = arith.divf %65, %66 : vector<32x1xf32>
    %68 = vector.broadcast %67 : vector<32x1xf32> to vector<32x32xf32>
    %69 = arith.mulf %2, %68 : vector<32x32xf32>
    %70 = vector.extract_strided_slice %69 {offsets = [0, 0], sizes = [16, 32], strides = [1, 1]} : vector<32x32xf32> to vector<16x32xf32>
    %c0_29 = arith.constant 0 : index
    %c0_30 = arith.constant 0 : index
    %71 = vector.load %arg3[%c0_29, %c0_30] : memref<16x32xf32, #tpu.memory_space<vmem>>, vector<16x32xf32>
    tpu.vector_store %arg3[%c0_29, %c0_30], %70 {strides = array<i32>} : memref<16x32xf32, #tpu.memory_space<vmem>>, vector<16x32xf32>,
    %72 = vector.extract_strided_slice %69 {offsets = [16, 0], sizes = [16, 32], strides = [1, 1]} : vector<32x32xf32> to vector<16x32xf32>
    %c0_31 = arith.constant 0 : index
    %c0_32 = arith.constant 0 : index
    %73 = vector.load %arg4[%c0_31, %c0_32] : memref<16x32xf32, #tpu.memory_space<vmem>>, vector<16x32xf32>
    tpu.vector_store %arg4[%c0_31, %c0_32], %72 {strides = array<i32>} : memref<16x32xf32, #tpu.memory_space<vmem>>, vector<16x32xf32>,
    return
  }
}

</mosaic_0001>

<llo_original>
// kernel: tpu_custom_call.1
$region0: #{tpu_custom_call.1}
  #allocation0 [shape = 'u32[]', space=smem, size = 0x4, offset = 0x4, fixed_abs, tag = 'smem constant byte address 0x4 - core index']
  #allocation1 [shape = 'u32[72,128]{1,0:T(1,128)}', space=vmem, size = 0x9000, scoped, tag = 'internal scratch']
  %s0 = inlined_call_operand.hbm [shape: f32[16,32], index: 0, kind: input, shape index: {}, may-alias: {0,3}]
  %s1 = inlined_call_operand.hbm [shape: f32[16,32], index: 1, kind: input, shape index: {}, may-alias: {1,4}]
  %s2 = inlined_call_operand.vmem [shape: f32[112,64], index: 2, kind: input, shape index: {}]
  %s3 = inlined_call_operand.hbm [shape: f32[16,32], index: 3, kind: output, shape index: {0}, may-alias: {0,3}]
  %s4 = inlined_call_operand.hbm [shape: f32[16,32], index: 4, kind: output, shape index: {1}, may-alias: {1,4}]
  %5 = xla_tuple %s3, %s4
  %s6 = sld [smem:[#allocation0]]
  $region38: #{tpu_custom_call.1} parent=0
    _
  %s8 = ssub.s32 1, %s6
  %s9 = scalar_select 0, %s8, %s6
  $region1: #{tpu_custom_call.1} parent=0
    #allocation2 [shape = 'u8[8192]{0}', space=vmem, size = 0x2000, scoped, tag = 'input window, operand 0, single buffered']
    #allocation3 [shape = 's32[1]{0}', space=sflag, size = 0x4, scoped, tag = 'scoped memory for tpu_custom_call.1']
    #allocation4 [shape = 's32[1]{0}', space=sflag, size = 0x4, scoped, tag = 'scoped memory for tpu_custom_call.1']
    #allocation5 [shape = 'u8[8192]{0}', space=vmem, size = 0x2000, scoped, tag = 'input window, operand 1, single buffered']
    #allocation6 [shape = 's32[1]{0}', space=sflag, size = 0x4, scoped, tag = 'scoped memory for tpu_custom_call.1']
    #allocation7 [shape = 'u8[8192]{0}', space=vmem, size = 0x2000, scoped, tag = 'output window, operand 0, single buffered']
    #allocation8 [shape = 'u8[8192]{0}', space=vmem, size = 0x2000, scoped, tag = 'output window, operand 1, single buffered']
    #allocation9 [shape = 's32[1]{0}', space=sflag, size = 0x4, scoped, tag = 'scoped memory for tpu_custom_call.1']
    %10 = vsyncpa [#allocation3], 0
    %11 = vsyncpa [#allocation6], 0
    %12 = vsyncpa [#allocation4], 0
    %13 = vsyncpa [#allocation9], 0
    // Predicated region
    $region2: #{tpu_custom_call.1} parent=1 // pred_check
      _
    $region3: #{tpu_custom_call.1} parent=1 // pred_check_branch
      %15 = sbr.rel (0) target = $region5
    $region4: #{tpu_custom_call.1} parent=1 // pred_region
      %17 = vsyncadd [#allocation3], 0
      %s18 = sshll.u32 %s0, 4
      %s19 = int_to_ptr.hbm [resolvable:$true] %s18
      %s20 = sshll.u32 [#allocation2], 4
      %s21 = int_to_ptr.vmem [resolvable:$true] %s20
      %26 = dma.hbm_to_vmem [thread:$0]  %s19, 256, %s21, [#allocation3], 128, 128, 8
    $region5: #{tpu_custom_call.1} parent=1 // pred_fallthru
      _
    // Predicated region
    $region6: #{tpu_custom_call.1} parent=1 // pred_check
      _
    $region7: #{tpu_custom_call.1} parent=1 // pred_check_branch
      %28 = sbr.rel (0) target = $region9
    $region8: #{tpu_custom_call.1} parent=1 // pred_region
      %30 = vsyncadd [#allocation6], 0
      %s31 = sshll.u32 %s1, 4
      %s32 = int_to_ptr.hbm [resolvable:$true] %s31
      %s33 = sshll.u32 [#allocation5], 4
      %s34 = int_to_ptr.vmem [resolvable:$true] %s33
      %39 = dma.hbm_to_vmem [thread:$0]  %s32, 256, %s34, [#allocation6], 128, 128, 8
    $region9: #{tpu_custom_call.1} parent=1 // pred_fallthru
      _
    // Predicated region
    $region10: #{tpu_custom_call.1} parent=1 // pred_check
      _
    $region11: #{tpu_custom_call.1} parent=1 // pred_check_branch
      %41 = sbr.rel (0) target = $region13
    $region12: #{tpu_custom_call.1} parent=1 // pred_region
      _
    $region13: #{tpu_custom_call.1} parent=1 // pred_fallthru
      _
    // Predicated region
    $region14: #{tpu_custom_call.1} parent=1 // pred_check
      _
    $region15: #{tpu_custom_call.1} parent=1 // pred_check_branch
      %43 = sbr.rel (0) target = $region17
    $region16: #{tpu_custom_call.1} parent=1 // pred_region
      %45 = dma.done [#allocation3], 256
    $region17: #{tpu_custom_call.1} parent=1 // pred_fallthru
      _
    // Predicated region
    $region18: #{tpu_custom_call.1} parent=1 // pred_check
      _
    $region19: #{tpu_custom_call.1} parent=1 // pred_check_branch
      %47 = sbr.rel (0) target = $region21
    $region20: #{tpu_custom_call.1} parent=1 // pred_region
      %49 = dma.done [#allocation6], 256
    $region21: #{tpu_custom_call.1} parent=1 // pred_fallthru
      _
    %v50 = vld [vmem:[#allocation2] sm:$0xff]
    %v51 = vld [vmem:[#allocation2 + $0x8] sm:$0xff]
    %v52 = vld [vmem:[#allocation5] sm:$0xff]
    %v53 = vld [vmem:[#allocation5 + $0x8] sm:$0xff]
    %v54 = vld [vmem:[%s2] sm:$0xff]
    %v55 = vld [vmem:[%s2 + $0x8] sm:$0xff]
    %v56 = vld [vmem:[%s2 + $0x10] sm:$0xff]
    %v57 = vld [vmem:[%s2 + $0x18] sm:$0xff]
    %v58 = vld [vmem:[%s2 + $0x20] sm:$0xff]
    %v59 = vld [vmem:[%s2 + $0x28] sm:$0xff]
    %v60 = vld [vmem:[%s2 + $0x30] sm:$0xff]
    %v61 = vld [vmem:[%s2 + $0x38] sm:$0xff]
    %v62 = vld [vmem:[%s2 + $0x40] sm:$0xff]
    %v63 = vld [vmem:[%s2 + $0x48] sm:$0xff]
    %v64 = vld [vmem:[%s2 + $0x50] sm:$0xff]
    %v65 = vld [vmem:[%s2 + $0x58] sm:$0xff]
    %v66 = vld [vmem:[%s2 + $0x60] sm:$0xff]
    %v67 = vld [vmem:[%s2 + $0x68] sm:$0xff]
    %vm68 = vcmask 261120
    %v69 = vsel %vm68, %v50, 0.0
    %70 = vadd.xlane.f32.xlu0 %v69
    %v71 = vpop.xlane.xlu0 %70
    %v72 = vsel %vm68, %v51, 0.0
    %73 = vadd.xlane.f32.xlu0 %v72
    %v74 = vpop.xlane.xlu0 %73
    %v75 = vsel %vm68, %v52, 0.0
    %76 = vadd.xlane.f32.xlu0 %v75
    %v77 = vpop.xlane.xlu0 %76
    %v78 = vsel %vm68, %v53, 0.0
    %79 = vadd.xlane.f32.xlu0 %v78
    %v80 = vpop.xlane.xlu0 %79
    %v81 = vmul.f32 %v71, 0.03125
    %v82 = vmul.f32 %v74, 0.03125
    %v83 = vmul.f32 %v77, 0.03125
    %v84 = vmul.f32 %v80, 0.03125
    %v85 = vmul.f32 %v50, %v50
    %v86 = vmul.f32 %v51, %v51
    %v87 = vmul.f32 %v52, %v52
    %v88 = vmul.f32 %v53, %v53
    %v89 = vsel %vm68, %v85, 0.0
    %90 = vadd.xlane.f32.xlu0 %v89
    %v91 = vpop.xlane.xlu0 %90
    %v92 = vsel %vm68, %v86, 0.0
    %93 = vadd.xlane.f32.xlu0 %v92
    %v94 = vpop.xlane.xlu0 %93
    %v95 = vsel %vm68, %v87, 0.0
    %96 = vadd.xlane.f32.xlu0 %v95
    %v97 = vpop.xlane.xlu0 %96
    %v98 = vsel %vm68, %v88, 0.0
    %99 = vadd.xlane.f32.xlu0 %v98
    %v100 = vpop.xlane.xlu0 %99
    %v101 = vmul.f32 %v91, 0.03125
    %v102 = vmul.f32 %v94, 0.03125
    %v103 = vmul.f32 %v97, 0.03125
    %v104 = vmul.f32 %v100, 0.03125
    %v105 = vmul.f32 %v81, %v81
    %v106 = vmul.f32 %v82, %v82
    %v107 = vmul.f32 %v83, %v83
    %v108 = vmul.f32 %v84, %v84
    %v109 = vsub.f32 %v101, %v105
    %v110 = vsub.f32 %v102, %v106
    %v111 = vsub.f32 %v103, %v107
    %v112 = vsub.f32 %v104, %v108
    %v113 = vadd.f32 %v109, 1e-05
    %v114 = vadd.f32 %v110, 1e-05
    %v115 = vadd.f32 %v111, 1e-05
    %v116 = vadd.f32 %v112, 1e-05
    %v117 = vrsqrt.pop %v113
    %v118 = vmul.f32 %v117, %v113
    %v119 = vmul.f32 %v118, %v117
    %v120 = vmul.f32 0.5, %v119
    %v121 = vsub.f32 1.5, %v120
    %v122 = vmul.f32 %v117, %v121
    %vm123 = vweird.f32 %v113
    %vm124 = vweird.f32 %v117
    %vm125 = vmor %vm123, %vm124
    %v126 = vsel %vm125, %v117, %v122
    %v127 = vrsqrt.pop %v114
    %v128 = vmul.f32 %v127, %v114
    %v129 = vmul.f32 %v128, %v127
    %v130 = vmul.f32 0.5, %v129
    %v131 = vsub.f32 1.5, %v130
    %v132 = vmul.f32 %v127, %v131
    %vm133 = vweird.f32 %v114
    %vm134 = vweird.f32 %v127
    %vm135 = vmor %vm133, %vm134
    %v136 = vsel %vm135, %v127, %v132
    %v137 = vrsqrt.pop %v115
    %v138 = vmul.f32 %v137, %v115
    %v139 = vmul.f32 %v138, %v137
    %v140 = vmul.f32 0.5, %v139
    %v141 = vsub.f32 1.5, %v140
    %v142 = vmul.f32 %v137, %v141
    %vm143 = vweird.f32 %v115
    %vm144 = vweird.f32 %v137
    %vm145 = vmor %vm143, %vm144
    %v146 = vsel %vm145, %v137, %v142
    %v147 = vrsqrt.pop %v116
    %v148 = vmul.f32 %v147, %v116
    %v149 = vmul.f32 %v148, %v147
    %v150 = vmul.f32 0.5, %v149
    %v151 = vsub.f32 1.5, %v150
    %v152 = vmul.f32 %v147, %v151
    %vm153 = vweird.f32 %v116
    %vm154 = vweird.f32 %v147
    %vm155 = vmor %vm153, %vm154
    %v156 = vsel %vm155, %v147, %v152
    %v158 = vsel %vm68, %v50, 0
    %v161 = vsel %vm68, %v51, 0
    %v164 = vsel %vm68, %v52, 0
    %v167 = vsel %vm68, %v53, 0
    %169 = vmatpush.msra.mxu0 0.0
    %170 = vmatpush.msra.mxu0 0.0
    %171 = vmatpush.msra.mxu0 0.0
    %172 = vmatpush.msra.mxu0 0.0
    %173 = vmatpush.msra.mxu0 0.0
    %174 = vmatpush.msra.mxu0 0.0
    %175 = vmatpush.msra.mxu0 0.0
    %176 = vmatpush.msra.mxu0 0.0
    %177 = vmatpush.msra.mxu0 0.0
    %178 = vmatpush.msra.mxu0 0.0
    %179 = vmatpush.msra.mxu0 0.0
    %180 = vmatpush.msra.mxu0 0.0
    %v181 = vand.u32 %v57, 4294901760
    %182 = vmatpush.msra.mxu0 %v181
    %v183 = vand.u32 %v56, 4294901760
    %184 = vmatpush.msra.mxu0 %v183
    %v185 = vand.u32 %v55, 4294901760
    %186 = vmatpush.msra.mxu0 %v185
    %v187 = vand.u32 %v54, 4294901760
    %188 = vmatpush.msra.mxu0 %v187
    %v189 = vand.u32 %v158, 4294901760
    %v190 = vsub.f32 %v158, %v189
    %v191 = vand.u32 %v190, 4294901760
    %v192 = vsub.f32 %v190, %v191
    %v193 = vand.u32 %v192, 4294901760
    %194 = vmatmul.f32.gmra.mxu0 %v193
    %v195 = vpop.f32.mrf.mxu0
    %v196 = vadd.f32 0.0, %v195
    %v197 = vand.u32 %v161, 4294901760
    %v198 = vsub.f32 %v161, %v197
    %v199 = vand.u32 %v198, 4294901760
    %v200 = vsub.f32 %v198, %v199
    %v201 = vand.u32 %v200, 4294901760
    %202 = vmatmul.f32.gmra.mxu0 %v201
    %v203 = vpop.f32.mrf.mxu0
    %v204 = vadd.f32 0.0, %v203
    %v205 = vand.u32 %v164, 4294901760
    %v206 = vsub.f32 %v164, %v205
    %v207 = vand.u32 %v206, 4294901760
    %v208 = vsub.f32 %v206, %v207
    %v209 = vand.u32 %v208, 4294901760
    %210 = vmatmul.f32.gmra.mxu0 %v209
    %v211 = vpop.f32.mrf.mxu0
    %v212 = vadd.f32 0.0, %v211
    %v213 = vand.u32 %v167, 4294901760
    %v214 = vsub.f32 %v167, %v213
    %v215 = vand.u32 %v214, 4294901760
    %v216 = vsub.f32 %v214, %v215
    %v217 = vand.u32 %v216, 4294901760
    %218 = vmatmul.f32.gmra.mxu0 %v217
    %v219 = vpop.f32.mrf.mxu0
    %v220 = vadd.f32 0.0, %v219
    %221 = vdwg.mxu0
    %222 = vmatpush.msra.mxu0 0.0
    %223 = vmatpush.msra.mxu0 0.0
    %224 = vmatpush.msra.mxu0 0.0
    %225 = vmatpush.msra.mxu0 0.0
    %226 = vmatpush.msra.mxu0 0.0
    %227 = vmatpush.msra.mxu0 0.0
    %228 = vmatpush.msra.mxu0 0.0
    %229 = vmatpush.msra.mxu0 0.0
    %230 = vmatpush.msra.mxu0 0.0
    %231 = vmatpush.msra.mxu0 0.0
    %232 = vmatpush.msra.mxu0 0.0
    %233 = vmatpush.msra.mxu0 0.0
    %v234 = vand.u32 %v57, 4294901760
    %v235 = vsub.f32 %v57, %v234
    %v236 = vand.u32 %v235, 4294901760
    %v237 = vsub.f32 %v235, %v236
    %v238 = vand.u32 %v237, 4294901760
    %239 = vmatpush.msra.mxu0 %v238
    %v240 = vand.u32 %v56, 4294901760
    %v241 = vsub.f32 %v56, %v240
    %v242 = vand.u32 %v241, 4294901760
    %v243 = vsub.f32 %v241, %v242
    %v244 = vand.u32 %v243, 4294901760
    %245 = vmatpush.msra.mxu0 %v244
    %v246 = vand.u32 %v55, 4294901760
    %v247 = vsub.f32 %v55, %v246
    %v248 = vand.u32 %v247, 4294901760
    %v249 = vsub.f32 %v247, %v248
    %v250 = vand.u32 %v249, 4294901760
    %251 = vmatpush.msra.mxu0 %v250
    %v252 = vand.u32 %v54, 4294901760
    %v253 = vsub.f32 %v54, %v252
    %v254 = vand.u32 %v253, 4294901760
    %v255 = vsub.f32 %v253, %v254
    %v256 = vand.u32 %v255, 4294901760
    %257 = vmatpush.msra.mxu0 %v256
    %v258 = vand.u32 %v158, 4294901760
    %259 = vmatmul.f32.gmra.mxu0 %v258
    %v260 = vpop.f32.mrf.mxu0
    %v261 = vadd.f32 %v196, %v260
    %v262 = vand.u32 %v161, 4294901760
    %263 = vmatmul.f32.gmra.mxu0 %v262
    %v264 = vpop.f32.mrf.mxu0
    %v265 = vadd.f32 %v204, %v264
    %v266 = vand.u32 %v164, 4294901760
    %267 = vmatmul.f32.gmra.mxu0 %v266
    %v268 = vpop.f32.mrf.mxu0
    %v269 = vadd.f32 %v212, %v268
    %v270 = vand.u32 %v167, 4294901760
    %271 = vmatmul.f32.gmra.mxu0 %v270
    %v272 = vpop.f32.mrf.mxu0
    %v273 = vadd.f32 %v220, %v272
    %274 = vdwg.mxu0
    %275 = vmatpush.msra.mxu0 0.0
    %276 = vmatpush.msra.mxu0 0.0
    %277 = vmatpush.msra.mxu0 0.0
    %278 = vmatpush.msra.mxu0 0.0
    %279 = vmatpush.msra.mxu0 0.0
    %280 = vmatpush.msra.mxu0 0.0
    %281 = vmatpush.msra.mxu0 0.0
    %282 = vmatpush.msra.mxu0 0.0
    %283 = vmatpush.msra.mxu0 0.0
    %284 = vmatpush.msra.mxu0 0.0
    %285 = vmatpush.msra.mxu0 0.0
    %286 = vmatpush.msra.mxu0 0.0
    %v287 = vand.u32 %v57, 4294901760
    %v288 = vsub.f32 %v57, %v287
    %289 = vmatpush.msra.mxu0 %v288
    %v290 = vand.u32 %v56, 4294901760
    %v291 = vsub.f32 %v56, %v290
    %292 = vmatpush.msra.mxu0 %v291
    %v293 = vand.u32 %v55, 4294901760
    %v294 = vsub.f32 %v55, %v293
    %295 = vmatpush.msra.mxu0 %v294
    %v296 = vand.u32 %v54, 4294901760
    %v297 = vsub.f32 %v54, %v296
    %298 = vmatpush.msra.mxu0 %v297
    %v299 = vand.u32 %v158, 4294901760
    %v300 = vsub.f32 %v158, %v299
    %301 = vmatmul.f32.gmra.mxu0 %v300
    %v302 = vpop.f32.mrf.mxu0
    %v303 = vadd.f32 %v261, %v302
    %v304 = vand.u32 %v161, 4294901760
    %v305 = vsub.f32 %v161, %v304
    %306 = vmatmul.f32.gmra.mxu0 %v305
    %v307 = vpop.f32.mrf.mxu0
    %v308 = vadd.f32 %v265, %v307
    %v309 = vand.u32 %v164, 4294901760
    %v310 = vsub.f32 %v164, %v309
    %311 = vmatmul.f32.gmra.mxu0 %v310
    %v312 = vpop.f32.mrf.mxu0
    %v313 = vadd.f32 %v269, %v312
    %v314 = vand.u32 %v167, 4294901760
    %v315 = vsub.f32 %v167, %v314
    %316 = vmatmul.f32.gmra.mxu0 %v315
    %v317 = vpop.f32.mrf.mxu0
    %v318 = vadd.f32 %v273, %v317
    %319 = vdwg.mxu0
    %320 = vmatpush.msra.mxu0 0.0
    %321 = vmatpush.msra.mxu0 0.0
    %322 = vmatpush.msra.mxu0 0.0
    %323 = vmatpush.msra.mxu0 0.0
    %324 = vmatpush.msra.mxu0 0.0
    %325 = vmatpush.msra.mxu0 0.0
    %326 = vmatpush.msra.mxu0 0.0
    %327 = vmatpush.msra.mxu0 0.0
    %328 = vmatpush.msra.mxu0 0.0
    %329 = vmatpush.msra.mxu0 0.0
    %330 = vmatpush.msra.mxu0 0.0
    %331 = vmatpush.msra.mxu0 0.0
    %v332 = vand.u32 %v57, 4294901760
    %333 = vmatpush.msra.mxu0 %v332
    %v334 = vand.u32 %v56, 4294901760
    %335 = vmatpush.msra.mxu0 %v334
    %v336 = vand.u32 %v55, 4294901760
    %337 = vmatpush.msra.mxu0 %v336
    %v338 = vand.u32 %v54, 4294901760
    %339 = vmatpush.msra.mxu0 %v338
    %v340 = vand.u32 %v158, 4294901760
    %v341 = vsub.f32 %v158, %v340
    %v342 = vand.u32 %v341, 4294901760
    %343 = vmatmul.f32.gmra.mxu0 %v342
    %v344 = vpop.f32.mrf.mxu0
    %v345 = vadd.f32 %v303, %v344
    %v346 = vand.u32 %v161, 4294901760
    %v347 = vsub.f32 %v161, %v346
    %v348 = vand.u32 %v347, 4294901760
    %349 = vmatmul.f32.gmra.mxu0 %v348
    %v350 = vpop.f32.mrf.mxu0
    %v351 = vadd.f32 %v308, %v350
    %v352 = vand.u32 %v164, 4294901760
    %v353 = vsub.f32 %v164, %v352
    %v354 = vand.u32 %v353, 4294901760
    %355 = vmatmul.f32.gmra.mxu0 %v354
    %v356 = vpop.f32.mrf.mxu0
    %v357 = vadd.f32 %v313, %v356
    %v358 = vand.u32 %v167, 4294901760
    %v359 = vsub.f32 %v167, %v358
    %v360 = vand.u32 %v359, 4294901760
    %361 = vmatmul.f32.gmra.mxu0 %v360
    %v362 = vpop.f32.mrf.mxu0
    %v363 = vadd.f32 %v318, %v362
    %364 = vdwg.mxu0
    %365 = vmatpush.msra.mxu0 0.0
    %366 = vmatpush.msra.mxu0 0.0
    %367 = vmatpush.msra.mxu0 0.0
    %368 = vmatpush.msra.mxu0 0.0
    %369 = vmatpush.msra.mxu0 0.0
    %370 = vmatpush.msra.mxu0 0.0
    %371 = vmatpush.msra.mxu0 0.0
    %372 = vmatpush.msra.mxu0 0.0
    %373 = vmatpush.msra.mxu0 0.0
    %374 = vmatpush.msra.mxu0 0.0
    %375 = vmatpush.msra.mxu0 0.0
    %376 = vmatpush.msra.mxu0 0.0
    %v377 = vand.u32 %v57, 4294901760
    %v378 = vsub.f32 %v57, %v377
    %v379 = vand.u32 %v378, 4294901760
    %380 = vmatpush.msra.mxu0 %v379
    %v381 = vand.u32 %v56, 4294901760
    %v382 = vsub.f32 %v56, %v381
    %v383 = vand.u32 %v382, 4294901760
    %384 = vmatpush.msra.mxu0 %v383
    %v385 = vand.u32 %v55, 4294901760
    %v386 = vsub.f32 %v55, %v385
    %v387 = vand.u32 %v386, 4294901760
    %388 = vmatpush.msra.mxu0 %v387
    %v389 = vand.u32 %v54, 4294901760
    %v390 = vsub.f32 %v54, %v389
    %v391 = vand.u32 %v390, 4294901760
    %392 = vmatpush.msra.mxu0 %v391
    %v393 = vand.u32 %v158, 4294901760
    %394 = vmatmul.f32.gmra.mxu0 %v393
    %v395 = vpop.f32.mrf.mxu0
    %v396 = vadd.f32 %v345, %v395
    %v397 = vand.u32 %v161, 4294901760
    %398 = vmatmul.f32.gmra.mxu0 %v397
    %v399 = vpop.f32.mrf.mxu0
    %v400 = vadd.f32 %v351, %v399
    %v401 = vand.u32 %v164, 4294901760
    %402 = vmatmul.f32.gmra.mxu0 %v401
    %v403 = vpop.f32.mrf.mxu0
    %v404 = vadd.f32 %v357, %v403
    %v405 = vand.u32 %v167, 4294901760
    %406 = vmatmul.f32.gmra.mxu0 %v405
    %v407 = vpop.f32.mrf.mxu0
    %v408 = vadd.f32 %v363, %v407
    %409 = vdwg.mxu0
    %410 = vmatpush.msra.mxu0 0.0
    %411 = vmatpush.msra.mxu0 0.0
    %412 = vmatpush.msra.mxu0 0.0
    %413 = vmatpush.msra.mxu0 0.0
    %414 = vmatpush.msra.mxu0 0.0
    %415 = vmatpush.msra.mxu0 0.0
    %416 = vmatpush.msra.mxu0 0.0
    %417 = vmatpush.msra.mxu0 0.0
    %418 = vmatpush.msra.mxu0 0.0
    %419 = vmatpush.msra.mxu0 0.0
    %420 = vmatpush.msra.mxu0 0.0
    %421 = vmatpush.msra.mxu0 0.0
    %v422 = vand.u32 %v57, 4294901760
    %423 = vmatpush.msra.mxu0 %v422
    %v424 = vand.u32 %v56, 4294901760
    %425 = vmatpush.msra.mxu0 %v424
    %v426 = vand.u32 %v55, 4294901760
    %427 = vmatpush.msra.mxu0 %v426
    %v428 = vand.u32 %v54, 4294901760
    %429 = vmatpush.msra.mxu0 %v428
    %v430 = vand.u32 %v158, 4294901760
    %431 = vmatmul.f32.gmra.mxu0 %v430
    %v432 = vpop.f32.mrf.mxu0
    %v433 = vadd.f32 %v396, %v432
    %v434 = vand.u32 %v161, 4294901760
    %435 = vmatmul.f32.gmra.mxu0 %v434
    %v436 = vpop.f32.mrf.mxu0
    %v437 = vadd.f32 %v400, %v436
    %v438 = vand.u32 %v164, 4294901760
    %439 = vmatmul.f32.gmra.mxu0 %v438
    %v440 = vpop.f32.mrf.mxu0
    %v441 = vadd.f32 %v404, %v440
    %v442 = vand.u32 %v167, 4294901760
    %443 = vmatmul.f32.gmra.mxu0 %v442
    %v444 = vpop.f32.mrf.mxu0
    %v445 = vadd.f32 %v408, %v444
    %446 = vdwg.mxu0
    %v447 = vlaneseq
    %v448 = vshrl.u32 %v447, 7
    %v449 = vadd.s32 %v448, 8
    %v450 = vadd.s32 %v448, 16
    %v451 = vadd.s32 %v448, 24
    %vm452 = vcmp.lt.s32.totalorder %v448, 16
    %vm453 = vcmp.lt.s32.totalorder %v449, 16
    %vm454 = vcmp.lt.s32.totalorder %v450, 16
    %vm455 = vcmp.lt.s32.totalorder %v451, 16
    %v456 = vsel %vm452, 1, 0
    %v457 = vsel %vm453, 1, 0
    %v458 = vsel %vm454, 1, 0
    %v459 = vsel %vm455, 1, 0
    %vm460 = vcmp.eq.s32.totalorder %v456, 1
    %vm461 = vcmp.eq.s32.totalorder %v457, 1
    %vm462 = vcmp.eq.s32.totalorder %v458, 1
    %vm463 = vcmp.eq.s32.totalorder %v459, 1
    %468 = vrot.lane.b32.xlu0 %v433, 96
    %v469 = vpop.permute.xlu0 %468
    %470 = vrot.lane.b32.xlu0 %v437, 96
    %v471 = vpop.permute.xlu0 %470
    %472 = vrot.lane.b32.xlu0 %v441, 96
    %v473 = vpop.permute.xlu0 %472
    %474 = vrot.lane.b32.xlu0 %v445, 96
    %v475 = vpop.permute.xlu0 %474
    %v480 = vsel %vm460, %v433, %v469
    %v481 = vsel %vm461, %v437, %v471
    %v482 = vsel %vm462, %v441, %v473
    %v483 = vsel %vm463, %v445, %v475
    %v484 = vmul.f32 %v81, %v58
    %v485 = vmul.f32 %v82, %v59
    %v486 = vmul.f32 %v83, %v60
    %v487 = vmul.f32 %v84, %v61
    %v488 = vsub.f32 %v480, %v484
    %v489 = vsub.f32 %v481, %v485
    %v490 = vsub.f32 %v482, %v486
    %v491 = vsub.f32 %v483, %v487
    %v492 = vmul.f32 %v488, %v126
    %v493 = vmul.f32 %v489, %v136
    %v494 = vmul.f32 %v490, %v146
    %v495 = vmul.f32 %v491, %v156
    %500 = vrot.lane.b32.xlu0 %v58, 96
    %v501 = vpop.permute.xlu0 %500
    %502 = vrot.lane.b32.xlu0 %v59, 96
    %v503 = vpop.permute.xlu0 %502
    %504 = vrot.lane.b32.xlu0 %v60, 96
    %v505 = vpop.permute.xlu0 %504
    %506 = vrot.lane.b32.xlu0 %v61, 96
    %v507 = vpop.permute.xlu0 %506
    %v512 = vadd.f32 %v492, %v501
    %v513 = vadd.f32 %v493, %v503
    %v514 = vadd.f32 %v494, %v505
    %v515 = vadd.f32 %v495, %v507
    %v516 = vmul.f32 %v512, 0.5
    %v517 = vmul.f32 %v513, 0.5
    %v518 = vmul.f32 %v514, 0.5
    %v519 = vmul.f32 %v515, 0.5
    %v520 = vmul.f32 %v512, 0.70710677
    %v521 = vmul.f32 %v513, 0.70710677
    %v522 = vmul.f32 %v514, 0.70710677
    %v523 = vmul.f32 %v515, 0.70710677
    %v524 = vmul.f32 %v520, %v520
    %v525 = vmin.f32 16.0, %v524
    %v526 = vmul.f32 %v525, 2.1237322e-06
    %v527 = vadd.f32 %v526, 0.00028619796
    %v528 = vmul.f32 %v525, %v527
    %v529 = vadd.f32 %v528, 0.0036580483
    %v530 = vmul.f32 %v525, %v529
    %v531 = vadd.f32 %v530, 0.05243302
    %v532 = vmul.f32 %v525, %v531
    %v533 = vadd.f32 %v532, 0.18741608
    %v534 = vmul.f32 %v525, %v533
    %v535 = vadd.f32 %v534, 1.1283791
    %v536 = vmul.f32 %v520, %v535
    %v537 = vmul.f32 %v525, 3.8918573e-05
    %v538 = vadd.f32 %v537, 0.001143296
    %v539 = vmul.f32 %v525, %v538
    %v540 = vadd.f32 %v539, 0.014752088
    %v541 = vmul.f32 %v525, %v540
    %v542 = vadd.f32 %v541, 0.112945676
    %v543 = vmul.f32 %v525, %v542
    %v544 = vadd.f32 %v543, 0.4994258
    %v545 = vmul.f32 %v525, %v544
    %v546 = vadd.f32 %v545, 1.0
    %v547 = vrcp.pop %v546
    %v548 = vmul.f32 %v546, %v547
    %v549 = vsub.f32 1.0, %v548
    %v550 = vmul.f32 %v547, %v549
    %v551 = vadd.f32 %v547, %v550
    %vm552 = vweird.f32 %v546
    %vm553 = vweird.f32 %v547
    %vm554 = vmor %vm552, %vm553
    %v555 = vsel %vm554, %v547, %v551
    %v556 = vand.u32 2147483647, %v546
    %vm557 = vcmp.eq.f32.partialorder %v556, 8.507059e+37
    %v558 = vand.u32 %v546, 2147483648
    %v559 = vor.u32 1.1754944e-38, %v558
    %v560 = vsel %vm557, %v559, %v555
    %v561 = vmul.f32 %v536, %v560
    %v562 = vmin.f32 %v561, 1.0
    %v563 = vmax.f32 %v562, -1.0
    %v564 = vmul.f32 %v521, %v521
    %v565 = vmin.f32 16.0, %v564
    %v566 = vmul.f32 %v565, 2.1237322e-06
    %v567 = vadd.f32 %v566, 0.00028619796
    %v568 = vmul.f32 %v565, %v567
    %v569 = vadd.f32 %v568, 0.0036580483
    %v570 = vmul.f32 %v565, %v569
    %v571 = vadd.f32 %v570, 0.05243302
    %v572 = vmul.f32 %v565, %v571
    %v573 = vadd.f32 %v572, 0.18741608
    %v574 = vmul.f32 %v565, %v573
    %v575 = vadd.f32 %v574, 1.1283791
    %v576 = vmul.f32 %v521, %v575
    %v577 = vmul.f32 %v565, 3.8918573e-05
    %v578 = vadd.f32 %v577, 0.001143296
    %v579 = vmul.f32 %v565, %v578
    %v580 = vadd.f32 %v579, 0.014752088
    %v581 = vmul.f32 %v565, %v580
    %v582 = vadd.f32 %v581, 0.112945676
    %v583 = vmul.f32 %v565, %v582
    %v584 = vadd.f32 %v583, 0.4994258
    %v585 = vmul.f32 %v565, %v584
    %v586 = vadd.f32 %v585, 1.0
    %v587 = vrcp.pop %v586
    %v588 = vmul.f32 %v586, %v587
    %v589 = vsub.f32 1.0, %v588
    %v590 = vmul.f32 %v587, %v589
    %v591 = vadd.f32 %v587, %v590
    %vm592 = vweird.f32 %v586
    %vm593 = vweird.f32 %v587
    %vm594 = vmor %vm592, %vm593
    %v595 = vsel %vm594, %v587, %v591
    %v596 = vand.u32 2147483647, %v586
    %vm597 = vcmp.eq.f32.partialorder %v596, 8.507059e+37
    %v598 = vand.u32 %v586, 2147483648
    %v599 = vor.u32 1.1754944e-38, %v598
    %v600 = vsel %vm597, %v599, %v595
    %v601 = vmul.f32 %v576, %v600
    %v602 = vmin.f32 %v601, 1.0
    %v603 = vmax.f32 %v602, -1.0
    %v604 = vmul.f32 %v522, %v522
    %v605 = vmin.f32 16.0, %v604
    %v606 = vmul.f32 %v605, 2.1237322e-06
    %v607 = vadd.f32 %v606, 0.00028619796
    %v608 = vmul.f32 %v605, %v607
    %v609 = vadd.f32 %v608, 0.0036580483
    %v610 = vmul.f32 %v605, %v609
    %v611 = vadd.f32 %v610, 0.05243302
    %v612 = vmul.f32 %v605, %v611
    %v613 = vadd.f32 %v612, 0.18741608
    %v614 = vmul.f32 %v605, %v613
    %v615 = vadd.f32 %v614, 1.1283791
    %v616 = vmul.f32 %v522, %v615
    %v617 = vmul.f32 %v605, 3.8918573e-05
    %v618 = vadd.f32 %v617, 0.001143296
    %v619 = vmul.f32 %v605, %v618
    %v620 = vadd.f32 %v619, 0.014752088
    %v621 = vmul.f32 %v605, %v620
    %v622 = vadd.f32 %v621, 0.112945676
    %v623 = vmul.f32 %v605, %v622
    %v624 = vadd.f32 %v623, 0.4994258
    %v625 = vmul.f32 %v605, %v624
    %v626 = vadd.f32 %v625, 1.0
    %v627 = vrcp.pop %v626
    %v628 = vmul.f32 %v626, %v627
    %v629 = vsub.f32 1.0, %v628
    %v630 = vmul.f32 %v627, %v629
    %v631 = vadd.f32 %v627, %v630
    %vm632 = vweird.f32 %v626
    %vm633 = vweird.f32 %v627
    %vm634 = vmor %vm632, %vm633
    %v635 = vsel %vm634, %v627, %v631
    %v636 = vand.u32 2147483647, %v626
    %vm637 = vcmp.eq.f32.partialorder %v636, 8.507059e+37
    %v638 = vand.u32 %v626, 2147483648
    %v639 = vor.u32 1.1754944e-38, %v638
    %v640 = vsel %vm637, %v639, %v635
    %v641 = vmul.f32 %v616, %v640
    %v642 = vmin.f32 %v641, 1.0
    %v643 = vmax.f32 %v642, -1.0
    %v644 = vmul.f32 %v523, %v523
    %v645 = vmin.f32 16.0, %v644
    %v646 = vmul.f32 %v645, 2.1237322e-06
    %v647 = vadd.f32 %v646, 0.00028619796
    %v648 = vmul.f32 %v645, %v647
    %v649 = vadd.f32 %v648, 0.0036580483
    %v650 = vmul.f32 %v645, %v649
    %v651 = vadd.f32 %v650, 0.05243302
    %v652 = vmul.f32 %v645, %v651
    %v653 = vadd.f32 %v652, 0.18741608
    %v654 = vmul.f32 %v645, %v653
    %v655 = vadd.f32 %v654, 1.1283791
    %v656 = vmul.f32 %v523, %v655
    %v657 = vmul.f32 %v645, 3.8918573e-05
    %v658 = vadd.f32 %v657, 0.001143296
    %v659 = vmul.f32 %v645, %v658
    %v660 = vadd.f32 %v659, 0.014752088
    %v661 = vmul.f32 %v645, %v660
    %v662 = vadd.f32 %v661, 0.112945676
    %v663 = vmul.f32 %v645, %v662
    %v664 = vadd.f32 %v663, 0.4994258
    %v665 = vmul.f32 %v645, %v664
    %v666 = vadd.f32 %v665, 1.0
    %v667 = vrcp.pop %v666
    %v668 = vmul.f32 %v666, %v667
    %v669 = vsub.f32 1.0, %v668
    %v670 = vmul.f32 %v667, %v669
    %v671 = vadd.f32 %v667, %v670
    %vm672 = vweird.f32 %v666
    %vm673 = vweird.f32 %v667
    %vm674 = vmor %vm672, %vm673
    %v675 = vsel %vm674, %v667, %v671
    %v676 = vand.u32 2147483647, %v666
    %vm677 = vcmp.eq.f32.partialorder %v676, 8.507059e+37
    %v678 = vand.u32 %v666, 2147483648
    %v679 = vor.u32 1.1754944e-38, %v678
    %v680 = vsel %vm677, %v679, %v675
    %v681 = vmul.f32 %v656, %v680
    %v682 = vmin.f32 %v681, 1.0
    %v683 = vmax.f32 %v682, -1.0
    %v684 = vadd.f32 %v563, 1.0
    %v685 = vadd.f32 %v603, 1.0
    %v686 = vadd.f32 %v643, 1.0
    %v687 = vadd.f32 %v683, 1.0
    %v688 = vmul.f32 %v516, %v684
    %v689 = vmul.f32 %v517, %v685
    %v690 = vmul.f32 %v518, %v686
    %v691 = vmul.f32 %v519, %v687
    %694 = vrot.lane.b32.xlu0 %v62, 96
    %v695 = vpop.permute.xlu0 %694
    %696 = vrot.lane.b32.xlu0 %v63, 96
    %v697 = vpop.permute.xlu0 %696
    %v700 = vsel %vm68, %v62, 0
    %v702 = vsel %vm68, %v63, 0
    %704 = vmatpush.msra.mxu0 0.0
    %705 = vmatpush.msra.mxu0 0.0
    %706 = vmatpush.msra.mxu0 0.0
    %707 = vmatpush.msra.mxu0 0.0
    %708 = vmatpush.msra.mxu0 0.0
    %709 = vmatpush.msra.mxu0 0.0
    %710 = vmatpush.msra.mxu0 0.0
    %711 = vmatpush.msra.mxu0 0.0
    %712 = vmatpush.msra.mxu0 0.0
    %713 = vmatpush.msra.mxu0 0.0
    %714 = vmatpush.msra.mxu0 0.0
    %715 = vmatpush.msra.mxu0 0.0
    %v716 = vand.u32 %v691, 4294901760
    %717 = vmatpush.msra.mxu0 %v716
    %v718 = vand.u32 %v690, 4294901760
    %719 = vmatpush.msra.mxu0 %v718
    %v720 = vand.u32 %v689, 4294901760
    %721 = vmatpush.msra.mxu0 %v720
    %v722 = vand.u32 %v688, 4294901760
    %723 = vmatpush.msra.mxu0 %v722
    %v724 = vand.u32 %v700, 4294901760
    %v725 = vsub.f32 %v700, %v724
    %v726 = vand.u32 %v725, 4294901760
    %v727 = vsub.f32 %v725, %v726
    %v728 = vand.u32 %v727, 4294901760
    %729 = vmatmul.f32.gmra.mxu0 %v728
    %v730 = vpop.f32.mrf.mxu0
    %v731 = vadd.f32 %v695, %v730
    %v732 = vand.u32 %v702, 4294901760
    %v733 = vsub.f32 %v702, %v732
    %v734 = vand.u32 %v733, 4294901760
    %v735 = vsub.f32 %v733, %v734
    %v736 = vand.u32 %v735, 4294901760
    %737 = vmatmul.f32.gmra.mxu0 %v736
    %v738 = vpop.f32.mrf.mxu0
    %v739 = vadd.f32 %v697, %v738
    %740 = vdwg.mxu0
    %741 = vmatpush.msra.mxu0 0.0
    %742 = vmatpush.msra.mxu0 0.0
    %743 = vmatpush.msra.mxu0 0.0
    %744 = vmatpush.msra.mxu0 0.0
    %745 = vmatpush.msra.mxu0 0.0
    %746 = vmatpush.msra.mxu0 0.0
    %747 = vmatpush.msra.mxu0 0.0
    %748 = vmatpush.msra.mxu0 0.0
    %749 = vmatpush.msra.mxu0 0.0
    %750 = vmatpush.msra.mxu0 0.0
    %751 = vmatpush.msra.mxu0 0.0
    %752 = vmatpush.msra.mxu0 0.0
    %v753 = vand.u32 %v691, 4294901760
    %v754 = vsub.f32 %v691, %v753
    %v755 = vand.u32 %v754, 4294901760
    %v756 = vsub.f32 %v754, %v755
    %v757 = vand.u32 %v756, 4294901760
    %758 = vmatpush.msra.mxu0 %v757
    %v759 = vand.u32 %v690, 4294901760
    %v760 = vsub.f32 %v690, %v759
    %v761 = vand.u32 %v760, 4294901760
    %v762 = vsub.f32 %v760, %v761
    %v763 = vand.u32 %v762, 4294901760
    %764 = vmatpush.msra.mxu0 %v763
    %v765 = vand.u32 %v689, 4294901760
    %v766 = vsub.f32 %v689, %v765
    %v767 = vand.u32 %v766, 4294901760
    %v768 = vsub.f32 %v766, %v767
    %v769 = vand.u32 %v768, 4294901760
    %770 = vmatpush.msra.mxu0 %v769
    %v771 = vand.u32 %v688, 4294901760
    %v772 = vsub.f32 %v688, %v771
    %v773 = vand.u32 %v772, 4294901760
    %v774 = vsub.f32 %v772, %v773
    %v775 = vand.u32 %v774, 4294901760
    %776 = vmatpush.msra.mxu0 %v775
    %v777 = vand.u32 %v700, 4294901760
    %778 = vmatmul.f32.gmra.mxu0 %v777
    %v779 = vpop.f32.mrf.mxu0
    %v780 = vadd.f32 %v731, %v779
    %v781 = vand.u32 %v702, 4294901760
    %782 = vmatmul.f32.gmra.mxu0 %v781
    %v783 = vpop.f32.mrf.mxu0
    %v784 = vadd.f32 %v739, %v783
    %785 = vdwg.mxu0
    %786 = vmatpush.msra.mxu0 0.0
    %787 = vmatpush.msra.mxu0 0.0
    %788 = vmatpush.msra.mxu0 0.0
    %789 = vmatpush.msra.mxu0 0.0
    %790 = vmatpush.msra.mxu0 0.0
    %791 = vmatpush.msra.mxu0 0.0
    %792 = vmatpush.msra.mxu0 0.0
    %793 = vmatpush.msra.mxu0 0.0
    %794 = vmatpush.msra.mxu0 0.0
    %795 = vmatpush.msra.mxu0 0.0
    %796 = vmatpush.msra.mxu0 0.0
    %797 = vmatpush.msra.mxu0 0.0
    %v798 = vand.u32 %v691, 4294901760
    %v799 = vsub.f32 %v691, %v798
    %800 = vmatpush.msra.mxu0 %v799
    %v801 = vand.u32 %v690, 4294901760
    %v802 = vsub.f32 %v690, %v801
    %803 = vmatpush.msra.mxu0 %v802
    %v804 = vand.u32 %v689, 4294901760
    %v805 = vsub.f32 %v689, %v804
    %806 = vmatpush.msra.mxu0 %v805
    %v807 = vand.u32 %v688, 4294901760
    %v808 = vsub.f32 %v688, %v807
    %809 = vmatpush.msra.mxu0 %v808
    %v810 = vand.u32 %v700, 4294901760
    %v811 = vsub.f32 %v700, %v810
    %812 = vmatmul.f32.gmra.mxu0 %v811
    %v813 = vpop.f32.mrf.mxu0
    %v814 = vadd.f32 %v780, %v813
    %v815 = vand.u32 %v702, 4294901760
    %v816 = vsub.f32 %v702, %v815
    %817 = vmatmul.f32.gmra.mxu0 %v816
    %v818 = vpop.f32.mrf.mxu0
    %v819 = vadd.f32 %v784, %v818
    %820 = vdwg.mxu0
    %821 = vmatpush.msra.mxu0 0.0
    %822 = vmatpush.msra.mxu0 0.0
    %823 = vmatpush.msra.mxu0 0.0
    %824 = vmatpush.msra.mxu0 0.0
    %825 = vmatpush.msra.mxu0 0.0
    %826 = vmatpush.msra.mxu0 0.0
    %827 = vmatpush.msra.mxu0 0.0
    %828 = vmatpush.msra.mxu0 0.0
    %829 = vmatpush.msra.mxu0 0.0
    %830 = vmatpush.msra.mxu0 0.0
    %831 = vmatpush.msra.mxu0 0.0
    %832 = vmatpush.msra.mxu0 0.0
    %v833 = vand.u32 %v691, 4294901760
    %834 = vmatpush.msra.mxu0 %v833
    %v835 = vand.u32 %v690, 4294901760
    %836 = vmatpush.msra.mxu0 %v835
    %v837 = vand.u32 %v689, 4294901760
    %838 = vmatpush.msra.mxu0 %v837
    %v839 = vand.u32 %v688, 4294901760
    %840 = vmatpush.msra.mxu0 %v839
    %v841 = vand.u32 %v700, 4294901760
    %v842 = vsub.f32 %v700, %v841
    %v843 = vand.u32 %v842, 4294901760
    %844 = vmatmul.f32.gmra.mxu0 %v843
    %v845 = vpop.f32.mrf.mxu0
    %v846 = vadd.f32 %v814, %v845
    %v847 = vand.u32 %v702, 4294901760
    %v848 = vsub.f32 %v702, %v847
    %v849 = vand.u32 %v848, 4294901760
    %850 = vmatmul.f32.gmra.mxu0 %v849
    %v851 = vpop.f32.mrf.mxu0
    %v852 = vadd.f32 %v819, %v851
    %853 = vdwg.mxu0
    %854 = vmatpush.msra.mxu0 0.0
    %855 = vmatpush.msra.mxu0 0.0
    %856 = vmatpush.msra.mxu0 0.0
    %857 = vmatpush.msra.mxu0 0.0
    %858 = vmatpush.msra.mxu0 0.0
    %859 = vmatpush.msra.mxu0 0.0
    %860 = vmatpush.msra.mxu0 0.0
    %861 = vmatpush.msra.mxu0 0.0
    %862 = vmatpush.msra.mxu0 0.0
    %863 = vmatpush.msra.mxu0 0.0
    %864 = vmatpush.msra.mxu0 0.0
    %865 = vmatpush.msra.mxu0 0.0
    %v866 = vand.u32 %v691, 4294901760
    %v867 = vsub.f32 %v691, %v866
    %v868 = vand.u32 %v867, 4294901760
    %869 = vmatpush.msra.mxu0 %v868
    %v870 = vand.u32 %v690, 4294901760
    %v871 = vsub.f32 %v690, %v870
    %v872 = vand.u32 %v871, 4294901760
    %873 = vmatpush.msra.mxu0 %v872
    %v874 = vand.u32 %v689, 4294901760
    %v875 = vsub.f32 %v689, %v874
    %v876 = vand.u32 %v875, 4294901760
    %877 = vmatpush.msra.mxu0 %v876
    %v878 = vand.u32 %v688, 4294901760
    %v879 = vsub.f32 %v688, %v878
    %v880 = vand.u32 %v879, 4294901760
    %881 = vmatpush.msra.mxu0 %v880
    %v882 = vand.u32 %v700, 4294901760
    %883 = vmatmul.f32.gmra.mxu0 %v882
    %v884 = vpop.f32.mrf.mxu0
    %v885 = vadd.f32 %v846, %v884
    %v886 = vand.u32 %v702, 4294901760
    %887 = vmatmul.f32.gmra.mxu0 %v886
    %v888 = vpop.f32.mrf.mxu0
    %v889 = vadd.f32 %v852, %v888
    %890 = vdwg.mxu0
    %891 = vmatpush.msra.mxu0 0.0
    %892 = vmatpush.msra.mxu0 0.0
    %893 = vmatpush.msra.mxu0 0.0
    %894 = vmatpush.msra.mxu0 0.0
    %895 = vmatpush.msra.mxu0 0.0
    %896 = vmatpush.msra.mxu0 0.0
    %897 = vmatpush.msra.mxu0 0.0
    %898 = vmatpush.msra.mxu0 0.0
    %899 = vmatpush.msra.mxu0 0.0
    %900 = vmatpush.msra.mxu0 0.0
    %901 = vmatpush.msra.mxu0 0.0
    %902 = vmatpush.msra.mxu0 0.0
    %v903 = vand.u32 %v691, 4294901760
    %904 = vmatpush.msra.mxu0 %v903
    %v905 = vand.u32 %v690, 4294901760
    %906 = vmatpush.msra.mxu0 %v905
    %v907 = vand.u32 %v689, 4294901760
    %908 = vmatpush.msra.mxu0 %v907
    %v909 = vand.u32 %v688, 4294901760
    %910 = vmatpush.msra.mxu0 %v909
    %v911 = vand.u32 %v700, 4294901760
    %912 = vmatmul.f32.gmra.mxu0 %v911
    %v913 = vpop.f32.mrf.mxu0
    %v914 = vadd.f32 %v885, %v913
    %v915 = vand.u32 %v702, 4294901760
    %916 = vmatmul.f32.gmra.mxu0 %v915
    %v917 = vpop.f32.mrf.mxu0
    %v918 = vadd.f32 %v889, %v917
    %919 = vdwg.mxu0
    %v920 = vmul.f32 %v914, 0.5
    %v921 = vmul.f32 %v918, 0.5
    %v922 = vmul.f32 %v914, 0.70710677
    %v923 = vmul.f32 %v918, 0.70710677
    %v924 = vmul.f32 %v922, %v922
    %v925 = vmin.f32 16.0, %v924
    %v926 = vmul.f32 %v925, 2.1237322e-06
    %v927 = vadd.f32 %v926, 0.00028619796
    %v928 = vmul.f32 %v925, %v927
    %v929 = vadd.f32 %v928, 0.0036580483
    %v930 = vmul.f32 %v925, %v929
    %v931 = vadd.f32 %v930, 0.05243302
    %v932 = vmul.f32 %v925, %v931
    %v933 = vadd.f32 %v932, 0.18741608
    %v934 = vmul.f32 %v925, %v933
    %v935 = vadd.f32 %v934, 1.1283791
    %v936 = vmul.f32 %v922, %v935
    %v937 = vmul.f32 %v925, 3.8918573e-05
    %v938 = vadd.f32 %v937, 0.001143296
    %v939 = vmul.f32 %v925, %v938
    %v940 = vadd.f32 %v939, 0.014752088
    %v941 = vmul.f32 %v925, %v940
    %v942 = vadd.f32 %v941, 0.112945676
    %v943 = vmul.f32 %v925, %v942
    %v944 = vadd.f32 %v943, 0.4994258
    %v945 = vmul.f32 %v925, %v944
    %v946 = vadd.f32 %v945, 1.0
    %v947 = vrcp.pop %v946
    %v948 = vmul.f32 %v946, %v947
    %v949 = vsub.f32 1.0, %v948
    %v950 = vmul.f32 %v947, %v949
    %v951 = vadd.f32 %v947, %v950
    %vm952 = vweird.f32 %v946
    %vm953 = vweird.f32 %v947
    %vm954 = vmor %vm952, %vm953
    %v955 = vsel %vm954, %v947, %v951
    %v956 = vand.u32 2147483647, %v946
    %vm957 = vcmp.eq.f32.partialorder %v956, 8.507059e+37
    %v958 = vand.u32 %v946, 2147483648
    %v959 = vor.u32 1.1754944e-38, %v958
    %v960 = vsel %vm957, %v959, %v955
    %v961 = vmul.f32 %v936, %v960
    %v962 = vmin.f32 %v961, 1.0
    %v963 = vmax.f32 %v962, -1.0
    %v964 = vmul.f32 %v923, %v923
    %v965 = vmin.f32 16.0, %v964
    %v966 = vmul.f32 %v965, 2.1237322e-06
    %v967 = vadd.f32 %v966, 0.00028619796
    %v968 = vmul.f32 %v965, %v967
    %v969 = vadd.f32 %v968, 0.0036580483
    %v970 = vmul.f32 %v965, %v969
    %v971 = vadd.f32 %v970, 0.05243302
    %v972 = vmul.f32 %v965, %v971
    %v973 = vadd.f32 %v972, 0.18741608
    %v974 = vmul.f32 %v965, %v973
    %v975 = vadd.f32 %v974, 1.1283791
    %v976 = vmul.f32 %v923, %v975
    %v977 = vmul.f32 %v965, 3.8918573e-05
    %v978 = vadd.f32 %v977, 0.001143296
    %v979 = vmul.f32 %v965, %v978
    %v980 = vadd.f32 %v979, 0.014752088
    %v981 = vmul.f32 %v965, %v980
    %v982 = vadd.f32 %v981, 0.112945676
    %v983 = vmul.f32 %v965, %v982
    %v984 = vadd.f32 %v983, 0.4994258
    %v985 = vmul.f32 %v965, %v984
    %v986 = vadd.f32 %v985, 1.0
    %v987 = vrcp.pop %v986
    %v988 = vmul.f32 %v986, %v987
    %v989 = vsub.f32 1.0, %v988
    %v990 = vmul.f32 %v987, %v989
    %v991 = vadd.f32 %v987, %v990
    %vm992 = vweird.f32 %v986
    %vm993 = vweird.f32 %v987
    %vm994 = vmor %vm992, %vm993
    %v995 = vsel %vm994, %v987, %v991
    %v996 = vand.u32 2147483647, %v986
    %vm997 = vcmp.eq.f32.partialorder %v996, 8.507059e+37
    %v998 = vand.u32 %v986, 2147483648
    %v999 = vor.u32 1.1754944e-38, %v998
    %v1000 = vsel %vm997, %v999, %v995
    %v1001 = vmul.f32 %v976, %v1000
    %v1002 = vmin.f32 %v1001, 1.0
    %v1003 = vmax.f32 %v1002, -1.0
    %v1004 = vadd.f32 %v963, 1.0
    %v1005 = vadd.f32 %v1003, 1.0
    %v1006 = vmul.f32 %v920, %v1004
    %v1007 = vmul.f32 %v921, %v1005
    %v1008 = vsel %vm68, %v1006, 0.0
    %1009 = vadd.xlane.f32.xlu0 %v1008
    %v1010 = vpop.xlane.xlu0 %1009
    %v1011 = vsel %vm68, %v1007, 0.0
    %1012 = vadd.xlane.f32.xlu0 %v1011
    %v1013 = vpop.xlane.xlu0 %1012
    %v1014 = vmul.f32 %v1010, 0.03125
    %v1015 = vmul.f32 %v1013, 0.03125
    %1020 = vrot.lane.b32.xlu0 %v64, 112
    %v1021 = vpop.permute.xlu0 %1020
    %1022 = vrot.lane.b32.xlu0 %v65, 112
    %v1023 = vpop.permute.xlu0 %1022
    %1024 = vrot.lane.b32.xlu0 %v66, 112
    %v1025 = vpop.permute.xlu0 %1024
    %1026 = vrot.lane.b32.xlu0 %v67, 112
    %v1027 = vpop.permute.xlu0 %1026
    %vm1032 = vcmask 130048
    %v1033 = vsel %vm1032, %v64, 0
    %v1035 = vsel %vm1032, %v65, 0
    %v1037 = vsel %vm1032, %v66, 0
    %v1039 = vsel %vm1032, %v67, 0
    %1041 = vmatpush.msra.mxu0 0.0
    %1042 = vmatpush.msra.mxu0 0.0
    %1043 = vmatpush.msra.mxu0 0.0
    %1044 = vmatpush.msra.mxu0 0.0
    %1045 = vmatpush.msra.mxu0 0.0
    %1046 = vmatpush.msra.mxu0 0.0
    %1047 = vmatpush.msra.mxu0 0.0
    %1048 = vmatpush.msra.mxu0 0.0
    %1049 = vmatpush.msra.mxu0 0.0
    %1050 = vmatpush.msra.mxu0 0.0
    %1051 = vmatpush.msra.mxu0 0.0
    %1052 = vmatpush.msra.mxu0 0.0
    %1053 = vmatpush.msra.mxu0 0.0
    %1054 = vmatpush.msra.mxu0 0.0
    %v1055 = vand.u32 %v1015, 4294901760
    %1056 = vmatpush.msra.mxu0 %v1055
    %v1057 = vand.u32 %v1014, 4294901760
    %1058 = vmatpush.msra.mxu0 %v1057
    %v1059 = vand.u32 %v1033, 4294901760
    %v1060 = vsub.f32 %v1033, %v1059
    %v1061 = vand.u32 %v1060, 4294901760
    %v1062 = vsub.f32 %v1060, %v1061
    %v1063 = vand.u32 %v1062, 4294901760
    %1064 = vmatmul.f32.gmra.mxu0 %v1063
    %v1065 = vpop.f32.mrf.mxu0
    %v1066 = vadd.f32 %v1021, %v1065
    %v1067 = vand.u32 %v1035, 4294901760
    %v1068 = vsub.f32 %v1035, %v1067
    %v1069 = vand.u32 %v1068, 4294901760
    %v1070 = vsub.f32 %v1068, %v1069
    %v1071 = vand.u32 %v1070, 4294901760
    %1072 = vmatmul.f32.gmra.mxu0 %v1071
    %v1073 = vpop.f32.mrf.mxu0
    %v1074 = vadd.f32 %v1023, %v1073
    %v1075 = vand.u32 %v1037, 4294901760
    %v1076 = vsub.f32 %v1037, %v1075
    %v1077 = vand.u32 %v1076, 4294901760
    %v1078 = vsub.f32 %v1076, %v1077
    %v1079 = vand.u32 %v1078, 4294901760
    %1080 = vmatmul.f32.gmra.mxu0 %v1079
    %v1081 = vpop.f32.mrf.mxu0
    %v1082 = vadd.f32 %v1025, %v1081
    %v1083 = vand.u32 %v1039, 4294901760
    %v1084 = vsub.f32 %v1039, %v1083
    %v1085 = vand.u32 %v1084, 4294901760
    %v1086 = vsub.f32 %v1084, %v1085
    %v1087 = vand.u32 %v1086, 4294901760
    %1088 = vmatmul.f32.gmra.mxu0 %v1087
    %v1089 = vpop.f32.mrf.mxu0
    %v1090 = vadd.f32 %v1027, %v1089
    %1091 = vdwg.mxu0
    %1092 = vmatpush.msra.mxu0 0.0
    %1093 = vmatpush.msra.mxu0 0.0
    %1094 = vmatpush.msra.mxu0 0.0
    %1095 = vmatpush.msra.mxu0 0.0
    %1096 = vmatpush.msra.mxu0 0.0
    %1097 = vmatpush.msra.mxu0 0.0
    %1098 = vmatpush.msra.mxu0 0.0
    %1099 = vmatpush.msra.mxu0 0.0
    %1100 = vmatpush.msra.mxu0 0.0
    %1101 = vmatpush.msra.mxu0 0.0
    %1102 = vmatpush.msra.mxu0 0.0
    %1103 = vmatpush.msra.mxu0 0.0
    %1104 = vmatpush.msra.mxu0 0.0
    %1105 = vmatpush.msra.mxu0 0.0
    %v1106 = vand.u32 %v1015, 4294901760
    %v1107 = vsub.f32 %v1015, %v1106
    %v1108 = vand.u32 %v1107, 4294901760
    %v1109 = vsub.f32 %v1107, %v1108
    %v1110 = vand.u32 %v1109, 4294901760
    %1111 = vmatpush.msra.mxu0 %v1110
    %v1112 = vand.u32 %v1014, 4294901760
    %v1113 = vsub.f32 %v1014, %v1112
    %v1114 = vand.u32 %v1113, 4294901760
    %v1115 = vsub.f32 %v1113, %v1114
    %v1116 = vand.u32 %v1115, 4294901760
    %1117 = vmatpush.msra.mxu0 %v1116
    %v1118 = vand.u32 %v1033, 4294901760
    %1119 = vmatmul.f32.gmra.mxu0 %v1118
    %v1120 = vpop.f32.mrf.mxu0
    %v1121 = vadd.f32 %v1066, %v1120
    %v1122 = vand.u32 %v1035, 4294901760
    %1123 = vmatmul.f32.gmra.mxu0 %v1122
    %v1124 = vpop.f32.mrf.mxu0
    %v1125 = vadd.f32 %v1074, %v1124
    %v1126 = vand.u32 %v1037, 4294901760
    %1127 = vmatmul.f32.gmra.mxu0 %v1126
    %v1128 = vpop.f32.mrf.mxu0
    %v1129 = vadd.f32 %v1082, %v1128
    %v1130 = vand.u32 %v1039, 4294901760
    %1131 = vmatmul.f32.gmra.mxu0 %v1130
    %v1132 = vpop.f32.mrf.mxu0
    %v1133 = vadd.f32 %v1090, %v1132
    %1134 = vdwg.mxu0
    %1135 = vmatpush.msra.mxu0 0.0
    %1136 = vmatpush.msra.mxu0 0.0
    %1137 = vmatpush.msra.mxu0 0.0
    %1138 = vmatpush.msra.mxu0 0.0
    %1139 = vmatpush.msra.mxu0 0.0
    %1140 = vmatpush.msra.mxu0 0.0
    %1141 = vmatpush.msra.mxu0 0.0
    %1142 = vmatpush.msra.mxu0 0.0
    %1143 = vmatpush.msra.mxu0 0.0
    %1144 = vmatpush.msra.mxu0 0.0
    %1145 = vmatpush.msra.mxu0 0.0
    %1146 = vmatpush.msra.mxu0 0.0
    %1147 = vmatpush.msra.mxu0 0.0
    %1148 = vmatpush.msra.mxu0 0.0
    %v1149 = vand.u32 %v1015, 4294901760
    %v1150 = vsub.f32 %v1015, %v1149
    %1151 = vmatpush.msra.mxu0 %v1150
    %v1152 = vand.u32 %v1014, 4294901760
    %v1153 = vsub.f32 %v1014, %v1152
    %1154 = vmatpush.msra.mxu0 %v1153
    %v1155 = vand.u32 %v1033, 4294901760
    %v1156 = vsub.f32 %v1033, %v1155
    %1157 = vmatmul.f32.gmra.mxu0 %v1156
    %v1158 = vpop.f32.mrf.mxu0
    %v1159 = vadd.f32 %v1121, %v1158
    %v1160 = vand.u32 %v1035, 4294901760
    %v1161 = vsub.f32 %v1035, %v1160
    %1162 = vmatmul.f32.gmra.mxu0 %v1161
    %v1163 = vpop.f32.mrf.mxu0
    %v1164 = vadd.f32 %v1125, %v1163
    %v1165 = vand.u32 %v1037, 4294901760
    %v1166 = vsub.f32 %v1037, %v1165
    %1167 = vmatmul.f32.gmra.mxu0 %v1166
    %v1168 = vpop.f32.mrf.mxu0
    %v1169 = vadd.f32 %v1129, %v1168
    %v1170 = vand.u32 %v1039, 4294901760
    %v1171 = vsub.f32 %v1039, %v1170
    %1172 = vmatmul.f32.gmra.mxu0 %v1171
    %v1173 = vpop.f32.mrf.mxu0
    %v1174 = vadd.f32 %v1133, %v1173
    %1175 = vdwg.mxu0
    %1176 = vmatpush.msra.mxu0 0.0
    %1177 = vmatpush.msra.mxu0 0.0
    %1178 = vmatpush.msra.mxu0 0.0
    %1179 = vmatpush.msra.mxu0 0.0
    %1180 = vmatpush.msra.mxu0 0.0
    %1181 = vmatpush.msra.mxu0 0.0
    %1182 = vmatpush.msra.mxu0 0.0
    %1183 = vmatpush.msra.mxu0 0.0
    %1184 = vmatpush.msra.mxu0 0.0
    %1185 = vmatpush.msra.mxu0 0.0
    %1186 = vmatpush.msra.mxu0 0.0
    %1187 = vmatpush.msra.mxu0 0.0
    %1188 = vmatpush.msra.mxu0 0.0
    %1189 = vmatpush.msra.mxu0 0.0
    %v1190 = vand.u32 %v1015, 4294901760
    %1191 = vmatpush.msra.mxu0 %v1190
    %v1192 = vand.u32 %v1014, 4294901760
    %1193 = vmatpush.msra.mxu0 %v1192
    %v1194 = vand.u32 %v1033, 4294901760
    %v1195 = vsub.f32 %v1033, %v1194
    %v1196 = vand.u32 %v1195, 4294901760
    %1197 = vmatmul.f32.gmra.mxu0 %v1196
    %v1198 = vpop.f32.mrf.mxu0
    %v1199 = vadd.f32 %v1159, %v1198
    %v1200 = vand.u32 %v1035, 4294901760
    %v1201 = vsub.f32 %v1035, %v1200
    %v1202 = vand.u32 %v1201, 4294901760
    %1203 = vmatmul.f32.gmra.mxu0 %v1202
    %v1204 = vpop.f32.mrf.mxu0
    %v1205 = vadd.f32 %v1164, %v1204
    %v1206 = vand.u32 %v1037, 4294901760
    %v1207 = vsub.f32 %v1037, %v1206
    %v1208 = vand.u32 %v1207, 4294901760
    %1209 = vmatmul.f32.gmra.mxu0 %v1208
    %v1210 = vpop.f32.mrf.mxu0
    %v1211 = vadd.f32 %v1169, %v1210
    %v1212 = vand.u32 %v1039, 4294901760
    %v1213 = vsub.f32 %v1039, %v1212
    %v1214 = vand.u32 %v1213, 4294901760
    %1215 = vmatmul.f32.gmra.mxu0 %v1214
    %v1216 = vpop.f32.mrf.mxu0
    %v1217 = vadd.f32 %v1174, %v1216
    %1218 = vdwg.mxu0
    %1219 = vmatpush.msra.mxu0 0.0
    %1220 = vmatpush.msra.mxu0 0.0
    %1221 = vmatpush.msra.mxu0 0.0
    %1222 = vmatpush.msra.mxu0 0.0
    %1223 = vmatpush.msra.mxu0 0.0
    %1224 = vmatpush.msra.mxu0 0.0
    %1225 = vmatpush.msra.mxu0 0.0
    %1226 = vmatpush.msra.mxu0 0.0
    %1227 = vmatpush.msra.mxu0 0.0
    %1228 = vmatpush.msra.mxu0 0.0
    %1229 = vmatpush.msra.mxu0 0.0
    %1230 = vmatpush.msra.mxu0 0.0
    %1231 = vmatpush.msra.mxu0 0.0
    %1232 = vmatpush.msra.mxu0 0.0
    %v1233 = vand.u32 %v1015, 4294901760
    %v1234 = vsub.f32 %v1015, %v1233
    %v1235 = vand.u32 %v1234, 4294901760
    %1236 = vmatpush.msra.mxu0 %v1235
    %v1237 = vand.u32 %v1014, 4294901760
    %v1238 = vsub.f32 %v1014, %v1237
    %v1239 = vand.u32 %v1238, 4294901760
    %1240 = vmatpush.msra.mxu0 %v1239
    %v1241 = vand.u32 %v1033, 4294901760
    %1242 = vmatmul.f32.gmra.mxu0 %v1241
    %v1243 = vpop.f32.mrf.mxu0
    %v1244 = vadd.f32 %v1199, %v1243
    %v1245 = vand.u32 %v1035, 4294901760
    %1246 = vmatmul.f32.gmra.mxu0 %v1245
    %v1247 = vpop.f32.mrf.mxu0
    %v1248 = vadd.f32 %v1205, %v1247
    %v1249 = vand.u32 %v1037, 4294901760
    %1250 = vmatmul.f32.gmra.mxu0 %v1249
    %v1251 = vpop.f32.mrf.mxu0
    %v1252 = vadd.f32 %v1211, %v1251
    %v1253 = vand.u32 %v1039, 4294901760
    %1254 = vmatmul.f32.gmra.mxu0 %v1253
    %v1255 = vpop.f32.mrf.mxu0
    %v1256 = vadd.f32 %v1217, %v1255
    %1257 = vdwg.mxu0
    %1258 = vmatpush.msra.mxu0 0.0
    %1259 = vmatpush.msra.mxu0 0.0
    %1260 = vmatpush.msra.mxu0 0.0
    %1261 = vmatpush.msra.mxu0 0.0
    %1262 = vmatpush.msra.mxu0 0.0
    %1263 = vmatpush.msra.mxu0 0.0
    %1264 = vmatpush.msra.mxu0 0.0
    %1265 = vmatpush.msra.mxu0 0.0
    %1266 = vmatpush.msra.mxu0 0.0
    %1267 = vmatpush.msra.mxu0 0.0
    %1268 = vmatpush.msra.mxu0 0.0
    %1269 = vmatpush.msra.mxu0 0.0
    %1270 = vmatpush.msra.mxu0 0.0
    %1271 = vmatpush.msra.mxu0 0.0
    %v1272 = vand.u32 %v1015, 4294901760
    %1273 = vmatpush.msra.mxu0 %v1272
    %v1274 = vand.u32 %v1014, 4294901760
    %1275 = vmatpush.msra.mxu0 %v1274
    %v1276 = vand.u32 %v1033, 4294901760
    %1277 = vmatmul.f32.gmra.mxu0 %v1276
    %v1278 = vpop.f32.mrf.mxu0
    %v1279 = vadd.f32 %v1244, %v1278
    %v1280 = vand.u32 %v1035, 4294901760
    %1281 = vmatmul.f32.gmra.mxu0 %v1280
    %v1282 = vpop.f32.mrf.mxu0
    %v1283 = vadd.f32 %v1248, %v1282
    %v1284 = vand.u32 %v1037, 4294901760
    %1285 = vmatmul.f32.gmra.mxu0 %v1284
    %v1286 = vpop.f32.mrf.mxu0
    %v1287 = vadd.f32 %v1252, %v1286
    %v1288 = vand.u32 %v1039, 4294901760
    %1289 = vmatmul.f32.gmra.mxu0 %v1288
    %v1290 = vpop.f32.mrf.mxu0
    %v1291 = vadd.f32 %v1256, %v1290
    %1292 = vdwg.mxu0
    %v1293 = vxor.u32 %v1279, 2147483648
    %v1294 = vxor.u32 %v1283, 2147483648
    %v1295 = vxor.u32 %v1287, 2147483648
    %v1296 = vxor.u32 %v1291, 2147483648
    %v1297 = vmul.f32 %v1293, 1.442695
    %v1298 = vpow.pop %v1297
    %v1299 = vmul.f32 %v1294, 1.442695
    %v1300 = vpow.pop %v1299
    %v1301 = vmul.f32 %v1295, 1.442695
    %v1302 = vpow.pop %v1301
    %v1303 = vmul.f32 %v1296, 1.442695
    %v1304 = vpow.pop %v1303
    %v1305 = vadd.f32 %v1298, 1.0
    %v1306 = vadd.f32 %v1300, 1.0
    %v1307 = vadd.f32 %v1302, 1.0
    %v1308 = vadd.f32 %v1304, 1.0
    %v1309 = vrcp.pop %v1305
    %v1310 = vmul.f32 %v1305, %v1309
    %v1311 = vsub.f32 1.0, %v1310
    %v1312 = vmul.f32 %v1309, %v1311
    %v1313 = vadd.f32 %v1309, %v1312
    %vm1314 = vweird.f32 %v1305
    %vm1315 = vweird.f32 %v1309
    %vm1316 = vmor %vm1314, %vm1315
    %v1317 = vsel %vm1316, %v1309, %v1313
    %v1318 = vand.u32 2147483647, %v1305
    %vm1319 = vcmp.eq.f32.partialorder %v1318, 8.507059e+37
    %v1320 = vand.u32 %v1305, 2147483648
    %v1321 = vor.u32 1.1754944e-38, %v1320
    %v1322 = vsel %vm1319, %v1321, %v1317
    %v1323 = vmul.f32 1.0, %v1322
    %v1324 = vrcp.pop %v1306
    %v1325 = vmul.f32 %v1306, %v1324
    %v1326 = vsub.f32 1.0, %v1325
    %v1327 = vmul.f32 %v1324, %v1326
    %v1328 = vadd.f32 %v1324, %v1327
    %vm1329 = vweird.f32 %v1306
    %vm1330 = vweird.f32 %v1324
    %vm1331 = vmor %vm1329, %vm1330
    %v1332 = vsel %vm1331, %v1324, %v1328
    %v1333 = vand.u32 2147483647, %v1306
    %vm1334 = vcmp.eq.f32.partialorder %v1333, 8.507059e+37
    %v1335 = vand.u32 %v1306, 2147483648
    %v1336 = vor.u32 1.1754944e-38, %v1335
    %v1337 = vsel %vm1334, %v1336, %v1332
    %v1338 = vmul.f32 1.0, %v1337
    %v1339 = vrcp.pop %v1307
    %v1340 = vmul.f32 %v1307, %v1339
    %v1341 = vsub.f32 1.0, %v1340
    %v1342 = vmul.f32 %v1339, %v1341
    %v1343 = vadd.f32 %v1339, %v1342
    %vm1344 = vweird.f32 %v1307
    %vm1345 = vweird.f32 %v1339
    %vm1346 = vmor %vm1344, %vm1345
    %v1347 = vsel %vm1346, %v1339, %v1343
    %v1348 = vand.u32 2147483647, %v1307
    %vm1349 = vcmp.eq.f32.partialorder %v1348, 8.507059e+37
    %v1350 = vand.u32 %v1307, 2147483648
    %v1351 = vor.u32 1.1754944e-38, %v1350
    %v1352 = vsel %vm1349, %v1351, %v1347
    %v1353 = vmul.f32 1.0, %v1352
    %v1354 = vrcp.pop %v1308
    %v1355 = vmul.f32 %v1308, %v1354
    %v1356 = vsub.f32 1.0, %v1355
    %v1357 = vmul.f32 %v1354, %v1356
    %v1358 = vadd.f32 %v1354, %v1357
    %vm1359 = vweird.f32 %v1308
    %vm1360 = vweird.f32 %v1354
    %vm1361 = vmor %vm1359, %vm1360
    %v1362 = vsel %vm1361, %v1354, %v1358
    %v1363 = vand.u32 2147483647, %v1308
    %vm1364 = vcmp.eq.f32.partialorder %v1363, 8.507059e+37
    %v1365 = vand.u32 %v1308, 2147483648
    %v1366 = vor.u32 1.1754944e-38, %v1365
    %v1367 = vsel %vm1364, %v1366, %v1362
    %v1368 = vmul.f32 1.0, %v1367
    %1370 = vset.pattern.permute.xlu0 0
    %1371 = vperm.xlu0 %1370, %v1323
    %v1372 = vpop.permute.xlu0 %1371
    %1375 = vset.pattern.permute.xlu0 0
    %1376 = vperm.xlu0 %1375, %v1338
    %v1377 = vpop.permute.xlu0 %1376
    %1380 = vset.pattern.permute.xlu0 0
    %1381 = vperm.xlu0 %1380, %v1353
    %v1382 = vpop.permute.xlu0 %1381
    %1385 = vset.pattern.permute.xlu0 0
    %1386 = vperm.xlu0 %1385, %v1368
    %v1387 = vpop.permute.xlu0 %1386
    %v1389 = vmul.f32 %v50, %v1372
    %v1390 = vmul.f32 %v51, %v1377
    %v1391 = vmul.f32 %v52, %v1382
    %v1392 = vmul.f32 %v53, %v1387
    %1393 = vst.msk [vmem:[#allocation7] sm:$0xff] %vm68, %v1389
    %1394 = vst.msk [vmem:[#allocation7 + $0x8] sm:$0xff] %vm68, %v1390
    %1395 = vst.msk [vmem:[#allocation8] sm:$0xff] %vm68, %v1391
    %1396 = vst.msk [vmem:[#allocation8 + $0x8] sm:$0xff] %vm68, %v1392
    // Predicated region
    $region22: #{tpu_custom_call.1} parent=1 // pred_check
      _
    $region23: #{tpu_custom_call.1} parent=1 // pred_check_branch
      %1398 = sbr.rel (0) target = $region25
    $region24: #{tpu_custom_call.1} parent=1 // pred_region
      %1400 = vsyncadd [#allocation4], 0
      %s1401 = sshll.u32 [#allocation7], 4
      %s1402 = int_to_ptr.vmem [resolvable:$true] %s1401
      %s1403 = sshll.u32 %s3, 4
      %s1404 = int_to_ptr.hbm [resolvable:$true] %s1403
      %1409 = dma.vmem_to_hbm [thread:$0]  %s1402, 256, %s1404, [#allocation4], 128, 128, 8
    $region25: #{tpu_custom_call.1} parent=1 // pred_fallthru
      _
    // Predicated region
    $region26: #{tpu_custom_call.1} parent=1 // pred_check
      _
    $region27: #{tpu_custom_call.1} parent=1 // pred_check_branch
      %1411 = sbr.rel (0) target = $region29
    $region28: #{tpu_custom_call.1} parent=1 // pred_region
      %1413 = vsyncadd [#allocation9], 0
      %s1414 = sshll.u32 [#allocation8], 4
      %s1415 = int_to_ptr.vmem [resolvable:$true] %s1414
      %s1416 = sshll.u32 %s4, 4
      %s1417 = int_to_ptr.hbm [resolvable:$true] %s1416
      %1422 = dma.vmem_to_hbm [thread:$0]  %s1415, 256, %s1417, [#allocation9], 128, 128, 8
    $region29: #{tpu_custom_call.1} parent=1 // pred_fallthru
      _
    // Predicated region
    $region30: #{tpu_custom_call.1} parent=1 // pred_check
      _
    $region31: #{tpu_custom_call.1} parent=1 // pred_check_branch
      %1424 = sbr.rel (0) target = $region33
    $region32: #{tpu_custom_call.1} parent=1 // pred_region
      %1426 = dma.done [#allocation4], 256
    $region33: #{tpu_custom_call.1} parent=1 // pred_fallthru
      _
    // Predicated region
    $region34: #{tpu_custom_call.1} parent=1 // pred_check
      _
    $region35: #{tpu_custom_call.1} parent=1 // pred_check_branch
      %1428 = sbr.rel (0) target = $region37
    $region36: #{tpu_custom_call.1} parent=1 // pred_region
      %1430 = dma.done [#allocation9], 256
    $region37: #{tpu_custom_call.1} parent=1 // pred_fallthru
      _
    %1431 = vsyncpa [#allocation3], 1
    %1432 = vsyncpa [#allocation6], 1
    %1433 = vsyncpa [#allocation4], 1
    %1434 = vsyncpa [#allocation9], 1

</llo_original>
